<compile_context>
chip_gen: v6e
topology: v6e:2x2x1
jax: 0.10.0
libtpu: 0.0.40
codegen_flags: <defaults>
</compile_context>

<pallas_src>
import math

import jax
import jax.numpy as jnp
from jax import lax
from jax.experimental import pallas as pl
from jax.experimental.pallas import tpu as pltpu


# ----------------------------------------------------------------------------
# Fused BasicTransformerBlock kernel (one (batch, query-tile) per program)
# ----------------------------------------------------------------------------
def _layernorm(x, g, b, eps=1e-5):
    # Single-pass statistics: one fused sum / sum-of-squares reduction
    # (halves the XLU cross-lane reduce traffic vs. two jnp.mean calls).
    inv_n = 1.0 / x.shape[-1]
    s = jnp.sum(x, axis=-1, keepdims=True)
    s2 = jnp.sum(x * x, axis=-1, keepdims=True)
    mean = s * inv_n
    var = s2 * inv_n - mean * mean
    return (x - mean) * lax.rsqrt(var + eps) * g + b


def _make_block_kernel(heads, compute_dtype):
    cdt = compute_dtype

    def attention(xn, ctx_c, wq_ref, wk_ref, wv_ref, wo_ref, bo_ref, acc_ref):
        """xn: (TQ, Cq) f32 post-LN query rows.  ctx_c: (M, Ckv) already in
        compute dtype.  Per-head weights stacked along axis 0:
        wq (heads, Cq, d) [scale folded in], wk/wv (heads, Ckv, d),
        wo (heads, d, C).  acc_ref: (TQ, C) f32 VMEM scratch accumulator."""
        xn_c = xn.astype(cdt)
        acc_ref[...] = jnp.zeros_like(acc_ref)

        def head_body(h, carry):
            # Projections for ONE head only -> live ranges bounded by the loop.
            qh = jnp.dot(xn_c, wq_ref[h],
                         preferred_element_type=jnp.float32).astype(cdt)   # (TQ, d)
            kh = jnp.dot(ctx_c, wk_ref[h],
                         preferred_element_type=jnp.float32).astype(cdt)   # (M, d)
            vh = jnp.dot(ctx_c, wv_ref[h],
                         preferred_element_type=jnp.float32).astype(cdt)   # (M, d)
            sim = lax.dot_general(qh, kh, (((1,), (1,)), ((), ())),
                                  preferred_element_type=jnp.float32)      # (TQ, M)
            sim = sim - jnp.max(sim, axis=-1, keepdims=True)
            p = jnp.exp(sim)                                                # f32 exp
            # exact reciprocal keeps the tight reference tolerance
            p = p * pl.reciprocal(jnp.sum(p, axis=-1, keepdims=True))
            pv = jnp.dot(p.astype(cdt), vh,
                         preferred_element_type=jnp.float32)                # (TQ, d)
            # Standard-FLOP output projection: the per-head (d, C) slice of Wo,
            # accumulated into the lane-dense (TQ, C) scratch.  Sum over heads
            # equals the single (TQ, QKV) @ (QKV, C) projection.
            acc_ref[...] += jnp.dot(pv.astype(cdt), wo_ref[h],
                                    preferred_element_type=jnp.float32)
            return carry

        lax.fori_loop(0, heads, head_body, 0)
        return acc_ref[...] + bo_ref[...]

    def kernel(x_ref, xkv_ref, ctx_ref,
               g1_ref, be1_ref, wq1_ref, wk1_ref, wv1_ref, wo1_ref, bo1_ref,
               g2_ref, be2_ref, wq2_ref, wk2_ref, wv2_ref, wo2_ref, bo2_ref,
               g3_ref, be3_ref, w1_ref, b1_ref, w2_ref, b2_ref,
               out_ref, acc_ref):
        x = x_ref[0]                      # (TQ, C)  residual / query rows (f32)
        x_kv = xkv_ref[0].astype(cdt)     # (N, C)   attn1 K/V context = RAW x
        ctx = ctx_ref[0].astype(cdt)      # (M, Cd)  attn2 K/V context

        # ---- attn1: Q from norm1(x); K/V from raw x (exactly as in the module) ----
        xn = _layernorm(x, g1_ref[...], be1_ref[...])
        x = x + attention(xn, x_kv, wq1_ref, wk1_ref, wv1_ref, wo1_ref,
                          bo1_ref[...], acc_ref)

        # ---- attn2: Q from norm2(x); K/V from context ----
        xn = _layernorm(x, g2_ref[...], be2_ref[...])
        x = x + attention(xn, ctx, wq2_ref, wk2_ref, wv2_ref, wo2_ref,
                          bo2_ref[...], acc_ref)

        # ---- feed-forward (exact erf GELU, like torch.nn.GELU default) ----
        xn = _layernorm(x, g3_ref[...], be3_ref[...])
        hdn = jnp.dot(xn.astype(cdt), w1_ref[...],
                      preferred_element_type=jnp.float32) + b1_ref[...]
        hdn = 0.5 * hdn * (1.0 + lax.erf(hdn * (1.0 / math.sqrt(2.0))))
        x = x + jnp.dot(hdn.astype(cdt), w2_ref[...],
                        preferred_element_type=jnp.float32) + b2_ref[...]

        out_ref[0] = x.astype(out_ref.dtype)

    return kernel


def basic_transformer_block(x, context, params, *, heads, tq=None,
                            compute_dtype=jnp.bfloat16):
    """x: (B, N, C); context: (B, M, Cd).  compute_dtype is the MXU operand
    dtype (bf16 for production on v5e/v6e/v7x; f32 for exact checks)."""
    B, N, C = x.shape
    _, M, Cd = context.shape
    qkv = params["attn1_wq"].shape[1]
    dim_head = qkv // heads
    hidden = params["ff_w1"].shape[1]
    scale = dim_head ** (-0.5)

    # Query-tile size (second, parallel grid axis).  Must divide N and be a
    # multiple of 8 (sublane) unless it equals N.
    if tq is None:
        tq = N if N <= 512 else 512
    if N % tq != 0 or (tq != N and tq % 8 != 0):
        tq = N
    n_tiles = N // tq

    # ---- wrapper-side (trace-time) weight prep ----
    #   * softmax scale folded into Wq
    #   * per-head weight stacks so the kernel never lane-slices activations
    def stack_in(w):    # (Cin, qkv) -> (heads, Cin, d)
        cin = w.shape[0]
        return jnp.transpose(w.reshape(cin, heads, dim_head),
                             (1, 0, 2)).astype(compute_dtype)

    def stack_out(w):   # (qkv, C) -> (heads, d, C)
        return w.reshape(heads, dim_head, C).astype(compute_dtype)

    row = lambda a: a.reshape(1, -1).astype(jnp.float32)

    weights = [
        row(params["norm1_g"]), row(params["norm1_b"]),
        stack_in(params["attn1_wq"] * scale), stack_in(params["attn1_wk"]),
        stack_in(params["attn1_wv"]), stack_out(params["attn1_wo"]),
        row(params["attn1_bo"]),
        row(params["norm2_g"]), row(params["norm2_b"]),
        stack_in(params["attn2_wq"] * scale), stack_in(params["attn2_wk"]),
        stack_in(params["attn2_wv"]), stack_out(params["attn2_wo"]),
        row(params["attn2_bo"]),
        row(params["norm3_g"]), row(params["norm3_b"]),
        params["ff_w1"].astype(compute_dtype), row(params["ff_b1"]),
        params["ff_w2"].astype(compute_dtype), row(params["ff_b2"]),
    ]

    # Whole-array blocks with a constant index map: fetched once, not per step.
    full = lambda a: pl.BlockSpec(a.shape, lambda b, i, _nd=a.ndim: (0,) * _nd)

    # ---- cost estimate (advisory, helps XLA schedule around the call) ----
    flops = 2 * B * (
        3 * N * C * qkv          # attn1 q/k/v projections (context = x)
        + 2 * N * N * qkv        # attn1 QK^T + PV
        + N * qkv * C            # attn1 output projection
        + N * C * qkv            # attn2 q projection
        + 2 * M * Cd * qkv       # attn2 k/v projections
        + 2 * N * M * qkv        # attn2 QK^T + PV
        + N * qkv * C            # attn2 output projection
        + 2 * N * C * hidden     # feed-forward
    )
    transcendentals = B * (heads * N * (N + M) + N * hidden)
    weight_bytes = sum(int(w.size) * w.dtype.itemsize for w in weights)
    bytes_accessed = int((2 * x.size + context.size) * x.dtype.itemsize
                         + weight_bytes)
    cost = pl.CostEstimate(flops=int(flops),
                           transcendentals=int(transcendentals),
                           bytes_accessed=bytes_accessed)

    # ---- scoped VMEM limit sized to the actual working set ----
    act_bytes = 2 * 4 * (tq * C + N * C + M * Cd + tq * C)   # double-buffered blocks
    scratch_bytes = 4 * tq * C
    vmem_limit = max(int(1.5 * (act_bytes + 2 * weight_bytes + scratch_bytes))
                     + (4 << 20), 32 << 20)
    vmem_limit = min(vmem_limit, 64 << 20)

    kernel = _make_block_kernel(heads, compute_dtype)

    return pl.pallas_call(
        kernel,
        out_shape=jax.ShapeDtypeStruct((B, N, C), x.dtype),
        grid_spec=pltpu.PrefetchScalarGridSpec(
            num_scalar_prefetch=0,
            grid=(B, n_tiles),
            in_specs=[pl.BlockSpec((1, tq, C), lambda b, i: (b, i, 0)),   # query tile
                      pl.BlockSpec((1, N, C), lambda b, i: (b, 0, 0)),    # raw x (attn1 K/V)
                      pl.BlockSpec((1, M, Cd), lambda b, i: (b, 0, 0))]   # context (attn2 K/V)
                     + [full(w) for w in weights],
            out_specs=pl.BlockSpec((1, tq, C), lambda b, i: (b, i, 0)),
            scratch_shapes=[pltpu.VMEM((tq, C), jnp.float32)],
        ),
        compiler_params=pltpu.CompilerParams(
            dimension_semantics=("parallel", "parallel"),
            vmem_limit_bytes=vmem_limit),
        cost_estimate=cost,
    )(x, x, context, *weights)


# ----------------------------------------------------------------------------
# Pure-JAX reference (for correctness check)
# ----------------------------------------------------------------------------
def _ref_layernorm(x, g, b, eps=1e-5):
    mean = jnp.mean(x, axis=-1, keepdims=True)
    var = jnp.mean((x - mean) ** 2, axis=-1, keepdims=True)
    return (x - mean) / jnp.sqrt(var + eps) * g + b


def _ref_cross_attn(xq, ctx, wq, wk, wv, wo, bo, heads):
    B, N, _ = xq.shape
    M = ctx.shape[1]
    qkv = wq.shape[1]
    d = qkv // heads
    q = (xq @ wq).reshape(B, N, heads, d)
    k = (ctx @ wk).reshape(B, M, heads, d)
    v = (ctx @ wv).reshape(B, M, heads, d)
    sim = jnp.einsum("bihd,bjhd->bhij", q, k) * (d ** -0.5)
    attn = jax.nn.softmax(sim, axis=-1)
    o = jnp.einsum("bhij,bjhd->bihd", attn, v).reshape(B, N, qkv)
    return o @ wo + bo


def _ref_block(x, context, p, heads):
    x = _ref_cross_attn(_ref_layernorm(x, p["norm1_g"], p["norm1_b"]), x,
                        p["attn1_wq"], p["attn1_wk"], p["attn1_wv"],
                        p["attn1_wo"], p["attn1_bo"], heads) + x
    x = _ref_cross_attn(_ref_layernorm(x, p["norm2_g"], p["norm2_b"]), context,
                        p["attn2_wq"], p["attn2_wk"], p["attn2_wv"],
                        p["attn2_wo"], p["attn2_bo"], heads) + x
    h = _ref_layernorm(x, p["norm3_g"], p["norm3_b"]) @ p["ff_w1"] + p["ff_b1"]
    h = 0.5 * h * (1.0 + lax.erf(h / jnp.sqrt(2.0)))
    x = h @ p["ff_w2"] + p["ff_b2"] + x
    return x


# ----------------------------------------------------------------------------
if __name__ == "__main__":
    # Small, module-consistent shapes
    B, N, M = 2, 16, 8
    INC = 32            # query_dim / model dim
    CTX_DIM = 24        # context_dim for attn2
    QKV = 32            # qkv_dim
    HEADS = 4
    HIDDEN = INC * 4    # MLP hidden

    key = jax.random.PRNGKey(0)
    ks = iter(jax.random.split(key, 32))
    std = 0.05
    rnd = lambda shape: (jax.random.normal(next(ks), shape, jnp.float32) * std)

    params = {
        # norms
        "norm1_g": jnp.ones((INC,), jnp.float32), "norm1_b": jnp.zeros((INC,), jnp.float32),
        "norm2_g": jnp.ones((INC,), jnp.float32), "norm2_b": jnp.zeros((INC,), jnp.float32),
        "norm3_g": jnp.ones((INC,), jnp.float32), "norm3_b": jnp.zeros((INC,), jnp.float32),
        # attn1: query_dim=INC, context_dim=INC
        "attn1_wq": rnd((INC, QKV)), "attn1_wk": rnd((INC, QKV)), "attn1_wv": rnd((INC, QKV)),
        "attn1_wo": rnd((QKV, INC)), "attn1_bo": rnd((INC,)),
        # attn2: query_dim=INC, context_dim=CTX_DIM
        "attn2_wq": rnd((INC, QKV)), "attn2_wk": rnd((CTX_DIM, QKV)), "attn2_wv": rnd((CTX_DIM, QKV)),
        "attn2_wo": rnd((QKV, INC)), "attn2_bo": rnd((INC,)),
        # MLP
        "ff_w1": rnd((INC, HIDDEN)), "ff_b1": rnd((HIDDEN,)),
        "ff_w2": rnd((HIDDEN, INC)), "ff_b2": rnd((INC,)),
    }

    x = jax.random.normal(next(ks), (B, N, INC), jnp.float32)
    context = jax.random.normal(next(ks), (B, M, CTX_DIM), jnp.float32)

    ref = _ref_block(x, context, params, HEADS)

    # Exact f32 MXU-operand path (tight tolerance vs. the pure-JAX reference).
    # tq=8 exercises the (batch, query-tile) grid: 2x2 = 4 parallel steps.
    out = basic_transformer_block(x, context, params, heads=HEADS, tq=8,
                                  compute_dtype=jnp.float32)
    out = jax.block_until_ready(out)
    assert out.shape == (B, N, INC)
    assert jnp.allclose(out, ref, atol=1e-4, rtol=1e-4), "f32 mismatch vs reference"

    # Production setting: bf16 MXU operands, f32 accumulation / elementwise.
    out_bf16 = basic_transformer_block(x, context, params, heads=HEADS, tq=8,
                                       compute_dtype=jnp.bfloat16)
    out_bf16 = jax.block_until_ready(out_bf16)
    assert jnp.allclose(out_bf16, ref, atol=3e-2, rtol=3e-2), "bf16 mismatch vs reference"

    print("KERNEL_OK")
</pallas_src>

<mosaic_0001>
module attributes {stable_mosaic.version = 11 : i64} {
  func.func @kernel(%arg0: i32, %arg1: i32, %arg2: memref<1x8x32xf32, #tpu.memory_space<vmem>>, %arg3: memref<1x16x32xf32, #tpu.memory_space<vmem>>, %arg4: memref<1x8x24xf32, #tpu.memory_space<vmem>>, %arg5: memref<1x32xf32, #tpu.memory_space<vmem>>, %arg6: memref<1x32xf32, #tpu.memory_space<vmem>>, %arg7: memref<4x32x8xf32, #tpu.memory_space<vmem>>, %arg8: memref<4x32x8xf32, #tpu.memory_space<vmem>>, %arg9: memref<4x32x8xf32, #tpu.memory_space<vmem>>, %arg10: memref<4x8x32xf32, #tpu.memory_space<vmem>>, %arg11: memref<1x32xf32, #tpu.memory_space<vmem>>, %arg12: memref<1x32xf32, #tpu.memory_space<vmem>>, %arg13: memref<1x32xf32, #tpu.memory_space<vmem>>, %arg14: memref<4x32x8xf32, #tpu.memory_space<vmem>>, %arg15: memref<4x24x8xf32, #tpu.memory_space<vmem>>, %arg16: memref<4x24x8xf32, #tpu.memory_space<vmem>>, %arg17: memref<4x8x32xf32, #tpu.memory_space<vmem>>, %arg18: memref<1x32xf32, #tpu.memory_space<vmem>>, %arg19: memref<1x32xf32, #tpu.memory_space<vmem>>, %arg20: memref<1x32xf32, #tpu.memory_space<vmem>>, %arg21: memref<32x128xf32, #tpu.memory_space<vmem>>, %arg22: memref<1x128xf32, #tpu.memory_space<vmem>>, %arg23: memref<128x32xf32, #tpu.memory_space<vmem>>, %arg24: memref<1x32xf32, #tpu.memory_space<vmem>>, %arg25: memref<1x8x32xf32, #tpu.memory_space<vmem>>, %arg26: memref<8x32xf32, #tpu.memory_space<vmem>>) attributes {dimension_semantics = [#tpu.dimension_semantics<parallel>, #tpu.dimension_semantics<parallel>], iteration_bounds = array<i64: 2, 2>, scalar_prefetch = 0 : i64, scratch_operands = 1 : i64, tpu.core_type = #tpu.core_type<tc>, window_params = [{transform_indices = @transform_0, window_bounds = array<i64: 1, 8, 32>}, {transform_indices = @transform_1, window_bounds = array<i64: 1, 16, 32>}, {transform_indices = @transform_2, window_bounds = array<i64: 1, 8, 24>}, {pipeline_mode = #tpu.pipeline_mode<synchronous>, transform_indices = @transform_3, window_bounds = array<i64: 1, 32>}, {pipeline_mode = #tpu.pipeline_mode<synchronous>, transform_indices = @transform_4, window_bounds = array<i64: 1, 32>}, {pipeline_mode = #tpu.pipeline_mode<synchronous>, transform_indices = @transform_5, window_bounds = array<i64: 4, 32, 8>}, {pipeline_mode = #tpu.pipeline_mode<synchronous>, transform_indices = @transform_6, window_bounds = array<i64: 4, 32, 8>}, {pipeline_mode = #tpu.pipeline_mode<synchronous>, transform_indices = @transform_7, window_bounds = array<i64: 4, 32, 8>}, {pipeline_mode = #tpu.pipeline_mode<synchronous>, transform_indices = @transform_8, window_bounds = array<i64: 4, 8, 32>}, {pipeline_mode = #tpu.pipeline_mode<synchronous>, transform_indices = @transform_9, window_bounds = array<i64: 1, 32>}, {pipeline_mode = #tpu.pipeline_mode<synchronous>, transform_indices = @transform_10, window_bounds = array<i64: 1, 32>}, {pipeline_mode = #tpu.pipeline_mode<synchronous>, transform_indices = @transform_11, window_bounds = array<i64: 1, 32>}, {pipeline_mode = #tpu.pipeline_mode<synchronous>, transform_indices = @transform_12, window_bounds = array<i64: 4, 32, 8>}, {pipeline_mode = #tpu.pipeline_mode<synchronous>, transform_indices = @transform_13, window_bounds = array<i64: 4, 24, 8>}, {pipeline_mode = #tpu.pipeline_mode<synchronous>, transform_indices = @transform_14, window_bounds = array<i64: 4, 24, 8>}, {pipeline_mode = #tpu.pipeline_mode<synchronous>, transform_indices = @transform_15, window_bounds = array<i64: 4, 8, 32>}, {pipeline_mode = #tpu.pipeline_mode<synchronous>, transform_indices = @transform_16, window_bounds = array<i64: 1, 32>}, {pipeline_mode = #tpu.pipeline_mode<synchronous>, transform_indices = @transform_17, window_bounds = array<i64: 1, 32>}, {pipeline_mode = #tpu.pipeline_mode<synchronous>, transform_indices = @transform_18, window_bounds = array<i64: 1, 32>}, {pipeline_mode = #tpu.pipeline_mode<synchronous>, transform_indices = @transform_19, window_bounds = array<i64: 32, 128>}, {pipeline_mode = #tpu.pipeline_mode<synchronous>, transform_indices = @transform_20, window_bounds = array<i64: 1, 128>}, {pipeline_mode = #tpu.pipeline_mode<synchronous>, transform_indices = @transform_21, window_bounds = array<i64: 128, 32>}, {pipeline_mode = #tpu.pipeline_mode<synchronous>, transform_indices = @transform_22, window_bounds = array<i64: 1, 32>}, {transform_indices = @transform_23, window_bounds = array<i64: 1, 8, 32>}]} {
    %c0 = arith.constant 0 : index
    %c0_0 = arith.constant 0 : index
    %c0_1 = arith.constant 0 : index
    %0 = vector.load %arg2[%c0, %c0_0, %c0_1] : memref<1x8x32xf32, #tpu.memory_space<vmem>>, vector<1x8x32xf32>
    %1 = vector.shape_cast %0 : vector<1x8x32xf32> to vector<8x32xf32>
    %c0_2 = arith.constant 0 : index
    %c0_3 = arith.constant 0 : index
    %c0_4 = arith.constant 0 : index
    %2 = vector.load %arg3[%c0_2, %c0_3, %c0_4] : memref<1x16x32xf32, #tpu.memory_space<vmem>>, vector<1x16x32xf32>
    %3 = vector.shape_cast %2 : vector<1x16x32xf32> to vector<16x32xf32>
    %c0_5 = arith.constant 0 : index
    %c0_6 = arith.constant 0 : index
    %c0_7 = arith.constant 0 : index
    %4 = vector.load %arg4[%c0_5, %c0_6, %c0_7] : memref<1x8x24xf32, #tpu.memory_space<vmem>>, vector<1x8x24xf32>
    %5 = vector.shape_cast %4 : vector<1x8x24xf32> to vector<8x24xf32>
    %c0_8 = arith.constant 0 : index
    %c0_9 = arith.constant 0 : index
    %6 = vector.load %arg5[%c0_8, %c0_9] : memref<1x32xf32, #tpu.memory_space<vmem>>, vector<1x32xf32>
    %c0_10 = arith.constant 0 : index
    %c0_11 = arith.constant 0 : index
    %7 = vector.load %arg6[%c0_10, %c0_11] : memref<1x32xf32, #tpu.memory_space<vmem>>, vector<1x32xf32>
    %cst = arith.constant dense<0.000000e+00> : vector<8xf32>
    %8 = vector.multi_reduction <add>, %1, %cst [1] : vector<8x32xf32> to vector<8xf32>
    %9 = vector.shape_cast %8 : vector<8xf32> to vector<8x1xf32>
    %10 = arith.mulf %1, %1 : vector<8x32xf32>
    %cst_12 = arith.constant dense<0.000000e+00> : vector<8xf32>
    %11 = vector.multi_reduction <add>, %10, %cst_12 [1] : vector<8x32xf32> to vector<8xf32>
    %12 = vector.shape_cast %11 : vector<8xf32> to vector<8x1xf32>
    %cst_13 = arith.constant 3.125000e-02 : f32
    %13 = vector.broadcast %cst_13 : f32 to vector<8x1xf32>
    %14 = arith.mulf %9, %13 : vector<8x1xf32>
    %cst_14 = arith.constant 3.125000e-02 : f32
    %15 = vector.broadcast %cst_14 : f32 to vector<8x1xf32>
    %16 = arith.mulf %12, %15 : vector<8x1xf32>
    %17 = arith.mulf %14, %14 : vector<8x1xf32>
    %18 = arith.subf %16, %17 : vector<8x1xf32>
    %19 = vector.broadcast %14 : vector<8x1xf32> to vector<8x32xf32>
    %20 = arith.subf %1, %19 : vector<8x32xf32>
    %cst_15 = arith.constant 9.99999974E-6 : f32
    %21 = vector.broadcast %cst_15 : f32 to vector<8x1xf32>
    %22 = arith.addf %18, %21 : vector<8x1xf32>
    %23 = math.rsqrt %22 : vector<8x1xf32>
    %24 = vector.broadcast %23 : vector<8x1xf32> to vector<8x32xf32>
    %25 = arith.mulf %20, %24 : vector<8x32xf32>
    %26 = vector.broadcast %6 : vector<1x32xf32> to vector<8x32xf32>
    %27 = arith.mulf %25, %26 : vector<8x32xf32>
    %28 = vector.broadcast %7 : vector<1x32xf32> to vector<8x32xf32>
    %29 = arith.addf %27, %28 : vector<8x32xf32>
    %c0_16 = arith.constant 0 : index
    %c0_17 = arith.constant 0 : index
    %30 = vector.load %arg11[%c0_16, %c0_17] : memref<1x32xf32, #tpu.memory_space<vmem>>, vector<1x32xf32>
    %cst_18 = arith.constant 0.000000e+00 : f32
    %31 = vector.broadcast %cst_18 : f32 to vector<8x32xf32>
    %c0_19 = arith.constant 0 : index
    %c0_20 = arith.constant 0 : index
    %32 = vector.load %arg26[%c0_19, %c0_20] : memref<8x32xf32, #tpu.memory_space<vmem>>, vector<8x32xf32>
    tpu.vector_store %arg26[%c0_19, %c0_20], %31 {strides = array<i32>} : memref<8x32xf32, #tpu.memory_space<vmem>>, vector<8x32xf32>,
    %c0_i32 = arith.constant 0 : i32
    %c4_i32 = arith.constant 4 : i32
    %33 = arith.addi %c0_i32, %c4_i32 : i32
    %c1_i32 = arith.constant 1 : i32
    scf.for %arg27 = %c0_i32 to %33 step %c1_i32  : i32 {
      %116 = arith.index_cast %arg27 : i32 to index
      %c0_69 = arith.constant 0 : index
      %c0_70 = arith.constant 0 : index
      %117 = vector.load %arg7[%116, %c0_69, %c0_70] : memref<4x32x8xf32, #tpu.memory_space<vmem>>, vector<1x32x8xf32>
      %118 = vector.shape_cast %117 : vector<1x32x8xf32> to vector<32x8xf32>
      %cst_71 = arith.constant dense<0.000000e+00> : vector<8x8xf32>
      %119 = tpu.matmul %29, %118, %cst_71 {dimension_numbers = #tpu.dot_dimension_numbers<[1], [0], [0], [1], [0, 0, 1, 1], [], []>} : vector<8x32xf32>, vector<32x8xf32>, vector<8x8xf32> -> vector<8x8xf32>
      %120 = arith.index_cast %arg27 : i32 to index
      %c0_72 = arith.constant 0 : index
      %c0_73 = arith.constant 0 : index
      %121 = vector.load %arg8[%120, %c0_72, %c0_73] : memref<4x32x8xf32, #tpu.memory_space<vmem>>, vector<1x32x8xf32>
      %122 = vector.shape_cast %121 : vector<1x32x8xf32> to vector<32x8xf32>
      %cst_74 = arith.constant dense<0.000000e+00> : vector<16x8xf32>
      %123 = tpu.matmul %3, %122, %cst_74 {dimension_numbers = #tpu.dot_dimension_numbers<[1], [0], [0], [1], [0, 0, 1, 1], [], []>} : vector<16x32xf32>, vector<32x8xf32>, vector<16x8xf32> -> vector<16x8xf32>
      %124 = arith.index_cast %arg27 : i32 to index
      %c0_75 = arith.constant 0 : index
      %c0_76 = arith.constant 0 : index
      %125 = vector.load %arg9[%124, %c0_75, %c0_76] : memref<4x32x8xf32, #tpu.memory_space<vmem>>, vector<1x32x8xf32>
      %126 = vector.shape_cast %125 : vector<1x32x8xf32> to vector<32x8xf32>
      %cst_77 = arith.constant dense<0.000000e+00> : vector<16x8xf32>
      %127 = tpu.matmul %3, %126, %cst_77 {dimension_numbers = #tpu.dot_dimension_numbers<[1], [0], [0], [1], [0, 0, 1, 1], [], []>} : vector<16x32xf32>, vector<32x8xf32>, vector<16x8xf32> -> vector<16x8xf32>
      %cst_78 = arith.constant dense<0.000000e+00> : vector<8x16xf32>
      %128 = tpu.matmul %119, %123, %cst_78 {dimension_numbers = #tpu.dot_dimension_numbers<[1], [1], [0], [0], [0, 0, 1, 0], [], []>} : vector<8x8xf32>, vector<16x8xf32>, vector<8x16xf32> -> vector<8x16xf32>
      %cst_79 = arith.constant dense<0xFF800000> : vector<8xf32>
      %129 = vector.multi_reduction <maximumf>, %128, %cst_79 [1] : vector<8x16xf32> to vector<8xf32>
      %130 = vector.shape_cast %129 : vector<8xf32> to vector<8x1xf32>
      %131 = vector.broadcast %130 : vector<8x1xf32> to vector<8x16xf32>
      %132 = arith.subf %128, %131 : vector<8x16xf32>
      %133 = math.exp %132 : vector<8x16xf32>
      %cst_80 = arith.constant dense<0.000000e+00> : vector<8xf32>
      %134 = vector.multi_reduction <add>, %133, %cst_80 [1] : vector<8x16xf32> to vector<8xf32>
      %135 = vector.shape_cast %134 : vector<8xf32> to vector<8x1xf32>
      %136 = tpu.reciprocal %135 : vector<8x1xf32> -> vector<8x1xf32>
      %137 = vector.broadcast %136 : vector<8x1xf32> to vector<8x16xf32>
      %138 = arith.mulf %133, %137 : vector<8x16xf32>
      %cst_81 = arith.constant dense<0.000000e+00> : vector<8x8xf32>
      %139 = tpu.matmul %138, %127, %cst_81 {dimension_numbers = #tpu.dot_dimension_numbers<[1], [0], [0], [1], [0, 0, 1, 1], [], []>} : vector<8x16xf32>, vector<16x8xf32>, vector<8x8xf32> -> vector<8x8xf32>
      %c0_82 = arith.constant 0 : index
      %c0_83 = arith.constant 0 : index
      %140 = vector.load %arg26[%c0_82, %c0_83] : memref<8x32xf32, #tpu.memory_space<vmem>>, vector<8x32xf32>
      %141 = arith.index_cast %arg27 : i32 to index
      %c0_84 = arith.constant 0 : index
      %c0_85 = arith.constant 0 : index
      %142 = vector.load %arg10[%141, %c0_84, %c0_85] : memref<4x8x32xf32, #tpu.memory_space<vmem>>, vector<1x8x32xf32>
      %143 = vector.shape_cast %142 : vector<1x8x32xf32> to vector<8x32xf32>
      %cst_86 = arith.constant dense<0.000000e+00> : vector<8x32xf32>
      %144 = tpu.matmul %139, %143, %cst_86 {dimension_numbers = #tpu.dot_dimension_numbers<[1], [0], [0], [1], [0, 0, 1, 1], [], []>} : vector<8x8xf32>, vector<8x32xf32>, vector<8x32xf32> -> vector<8x32xf32>
      %145 = arith.addf %140, %144 : vector<8x32xf32>
      %c0_87 = arith.constant 0 : index
      %c0_88 = arith.constant 0 : index
      %146 = vector.load %arg26[%c0_87, %c0_88] : memref<8x32xf32, #tpu.memory_space<vmem>>, vector<8x32xf32>
      tpu.vector_store %arg26[%c0_87, %c0_88], %145 {strides = array<i32>} : memref<8x32xf32, #tpu.memory_space<vmem>>, vector<8x32xf32>,
    }
    %c4_i32_21 = arith.constant 4 : i32
    %c0_22 = arith.constant 0 : index
    %c0_23 = arith.constant 0 : index
    %34 = vector.load %arg26[%c0_22, %c0_23] : memref<8x32xf32, #tpu.memory_space<vmem>>, vector<8x32xf32>
    %35 = vector.broadcast %30 : vector<1x32xf32> to vector<8x32xf32>
    %36 = arith.addf %34, %35 : vector<8x32xf32>
    %37 = arith.addf %1, %36 : vector<8x32xf32>
    %c0_24 = arith.constant 0 : index
    %c0_25 = arith.constant 0 : index
    %38 = vector.load %arg12[%c0_24, %c0_25] : memref<1x32xf32, #tpu.memory_space<vmem>>, vector<1x32xf32>
    %c0_26 = arith.constant 0 : index
    %c0_27 = arith.constant 0 : index
    %39 = vector.load %arg13[%c0_26, %c0_27] : memref<1x32xf32, #tpu.memory_space<vmem>>, vector<1x32xf32>
    %cst_28 = arith.constant dense<0.000000e+00> : vector<8xf32>
    %40 = vector.multi_reduction <add>, %37, %cst_28 [1] : vector<8x32xf32> to vector<8xf32>
    %41 = vector.shape_cast %40 : vector<8xf32> to vector<8x1xf32>
    %42 = arith.mulf %37, %37 : vector<8x32xf32>
    %cst_29 = arith.constant dense<0.000000e+00> : vector<8xf32>
    %43 = vector.multi_reduction <add>, %42, %cst_29 [1] : vector<8x32xf32> to vector<8xf32>
    %44 = vector.shape_cast %43 : vector<8xf32> to vector<8x1xf32>
    %cst_30 = arith.constant 3.125000e-02 : f32
    %45 = vector.broadcast %cst_30 : f32 to vector<8x1xf32>
    %46 = arith.mulf %41, %45 : vector<8x1xf32>
    %cst_31 = arith.constant 3.125000e-02 : f32
    %47 = vector.broadcast %cst_31 : f32 to vector<8x1xf32>
    %48 = arith.mulf %44, %47 : vector<8x1xf32>
    %49 = arith.mulf %46, %46 : vector<8x1xf32>
    %50 = arith.subf %48, %49 : vector<8x1xf32>
    %51 = vector.broadcast %46 : vector<8x1xf32> to vector<8x32xf32>
    %52 = arith.subf %37, %51 : vector<8x32xf32>
    %cst_32 = arith.constant 9.99999974E-6 : f32
    %53 = vector.broadcast %cst_32 : f32 to vector<8x1xf32>
    %54 = arith.addf %50, %53 : vector<8x1xf32>
    %55 = math.rsqrt %54 : vector<8x1xf32>
    %56 = vector.broadcast %55 : vector<8x1xf32> to vector<8x32xf32>
    %57 = arith.mulf %52, %56 : vector<8x32xf32>
    %58 = vector.broadcast %38 : vector<1x32xf32> to vector<8x32xf32>
    %59 = arith.mulf %57, %58 : vector<8x32xf32>
    %60 = vector.broadcast %39 : vector<1x32xf32> to vector<8x32xf32>
    %61 = arith.addf %59, %60 : vector<8x32xf32>
    %c0_33 = arith.constant 0 : index
    %c0_34 = arith.constant 0 : index
    %62 = vector.load %arg18[%c0_33, %c0_34] : memref<1x32xf32, #tpu.memory_space<vmem>>, vector<1x32xf32>
    %cst_35 = arith.constant 0.000000e+00 : f32
    %63 = vector.broadcast %cst_35 : f32 to vector<8x32xf32>
    %c0_36 = arith.constant 0 : index
    %c0_37 = arith.constant 0 : index
    %64 = vector.load %arg26[%c0_36, %c0_37] : memref<8x32xf32, #tpu.memory_space<vmem>>, vector<8x32xf32>
    tpu.vector_store %arg26[%c0_36, %c0_37], %63 {strides = array<i32>} : memref<8x32xf32, #tpu.memory_space<vmem>>, vector<8x32xf32>,
    %c0_i32_38 = arith.constant 0 : i32
    %c4_i32_39 = arith.constant 4 : i32
    %65 = arith.addi %c0_i32_38, %c4_i32_39 : i32
    %c1_i32_40 = arith.constant 1 : i32
    scf.for %arg27 = %c0_i32_38 to %65 step %c1_i32_40  : i32 {
      %116 = arith.index_cast %arg27 : i32 to index
      %c0_69 = arith.constant 0 : index
      %c0_70 = arith.constant 0 : index
      %117 = vector.load %arg14[%116, %c0_69, %c0_70] : memref<4x32x8xf32, #tpu.memory_space<vmem>>, vector<1x32x8xf32>
      %118 = vector.shape_cast %117 : vector<1x32x8xf32> to vector<32x8xf32>
      %cst_71 = arith.constant dense<0.000000e+00> : vector<8x8xf32>
      %119 = tpu.matmul %61, %118, %cst_71 {dimension_numbers = #tpu.dot_dimension_numbers<[1], [0], [0], [1], [0, 0, 1, 1], [], []>} : vector<8x32xf32>, vector<32x8xf32>, vector<8x8xf32> -> vector<8x8xf32>
      %120 = arith.index_cast %arg27 : i32 to index
      %c0_72 = arith.constant 0 : index
      %c0_73 = arith.constant 0 : index
      %121 = vector.load %arg15[%120, %c0_72, %c0_73] : memref<4x24x8xf32, #tpu.memory_space<vmem>>, vector<1x24x8xf32>
      %122 = vector.shape_cast %121 : vector<1x24x8xf32> to vector<24x8xf32>
      %cst_74 = arith.constant dense<0.000000e+00> : vector<8x8xf32>
      %123 = tpu.matmul %5, %122, %cst_74 {dimension_numbers = #tpu.dot_dimension_numbers<[1], [0], [0], [1], [0, 0, 1, 1], [], []>} : vector<8x24xf32>, vector<24x8xf32>, vector<8x8xf32> -> vector<8x8xf32>
      %124 = arith.index_cast %arg27 : i32 to index
      %c0_75 = arith.constant 0 : index
      %c0_76 = arith.constant 0 : index
      %125 = vector.load %arg16[%124, %c0_75, %c0_76] : memref<4x24x8xf32, #tpu.memory_space<vmem>>, vector<1x24x8xf32>
      %126 = vector.shape_cast %125 : vector<1x24x8xf32> to vector<24x8xf32>
      %cst_77 = arith.constant dense<0.000000e+00> : vector<8x8xf32>
      %127 = tpu.matmul %5, %126, %cst_77 {dimension_numbers = #tpu.dot_dimension_numbers<[1], [0], [0], [1], [0, 0, 1, 1], [], []>} : vector<8x24xf32>, vector<24x8xf32>, vector<8x8xf32> -> vector<8x8xf32>
      %cst_78 = arith.constant dense<0.000000e+00> : vector<8x8xf32>
      %128 = tpu.matmul %119, %123, %cst_78 {dimension_numbers = #tpu.dot_dimension_numbers<[1], [1], [0], [0], [0, 0, 1, 0], [], []>} : vector<8x8xf32>, vector<8x8xf32>, vector<8x8xf32> -> vector<8x8xf32>
      %cst_79 = arith.constant dense<0xFF800000> : vector<8xf32>
      %129 = vector.multi_reduction <maximumf>, %128, %cst_79 [1] : vector<8x8xf32> to vector<8xf32>
      %130 = vector.shape_cast %129 : vector<8xf32> to vector<8x1xf32>
      %131 = vector.broadcast %130 : vector<8x1xf32> to vector<8x8xf32>
      %132 = arith.subf %128, %131 : vector<8x8xf32>
      %133 = math.exp %132 : vector<8x8xf32>
      %cst_80 = arith.constant dense<0.000000e+00> : vector<8xf32>
      %134 = vector.multi_reduction <add>, %133, %cst_80 [1] : vector<8x8xf32> to vector<8xf32>
      %135 = vector.shape_cast %134 : vector<8xf32> to vector<8x1xf32>
      %136 = tpu.reciprocal %135 : vector<8x1xf32> -> vector<8x1xf32>
      %137 = vector.broadcast %136 : vector<8x1xf32> to vector<8x8xf32>
      %138 = arith.mulf %133, %137 : vector<8x8xf32>
      %cst_81 = arith.constant dense<0.000000e+00> : vector<8x8xf32>
      %139 = tpu.matmul %138, %127, %cst_81 {dimension_numbers = #tpu.dot_dimension_numbers<[1], [0], [0], [1], [0, 0, 1, 1], [], []>} : vector<8x8xf32>, vector<8x8xf32>, vector<8x8xf32> -> vector<8x8xf32>
      %c0_82 = arith.constant 0 : index
      %c0_83 = arith.constant 0 : index
      %140 = vector.load %arg26[%c0_82, %c0_83] : memref<8x32xf32, #tpu.memory_space<vmem>>, vector<8x32xf32>
      %141 = arith.index_cast %arg27 : i32 to index
      %c0_84 = arith.constant 0 : index
      %c0_85 = arith.constant 0 : index
      %142 = vector.load %arg17[%141, %c0_84, %c0_85] : memref<4x8x32xf32, #tpu.memory_space<vmem>>, vector<1x8x32xf32>
      %143 = vector.shape_cast %142 : vector<1x8x32xf32> to vector<8x32xf32>
      %cst_86 = arith.constant dense<0.000000e+00> : vector<8x32xf32>
      %144 = tpu.matmul %139, %143, %cst_86 {dimension_numbers = #tpu.dot_dimension_numbers<[1], [0], [0], [1], [0, 0, 1, 1], [], []>} : vector<8x8xf32>, vector<8x32xf32>, vector<8x32xf32> -> vector<8x32xf32>
      %145 = arith.addf %140, %144 : vector<8x32xf32>
      %c0_87 = arith.constant 0 : index
      %c0_88 = arith.constant 0 : index
      %146 = vector.load %arg26[%c0_87, %c0_88] : memref<8x32xf32, #tpu.memory_space<vmem>>, vector<8x32xf32>
      tpu.vector_store %arg26[%c0_87, %c0_88], %145 {strides = array<i32>} : memref<8x32xf32, #tpu.memory_space<vmem>>, vector<8x32xf32>,
    }
    %c4_i32_41 = arith.constant 4 : i32
    %c0_42 = arith.constant 0 : index
    %c0_43 = arith.constant 0 : index
    %66 = vector.load %arg26[%c0_42, %c0_43] : memref<8x32xf32, #tpu.memory_space<vmem>>, vector<8x32xf32>
    %67 = vector.broadcast %62 : vector<1x32xf32> to vector<8x32xf32>
    %68 = arith.addf %66, %67 : vector<8x32xf32>
    %69 = arith.addf %37, %68 : vector<8x32xf32>
    %c0_44 = arith.constant 0 : index
    %c0_45 = arith.constant 0 : index
    %70 = vector.load %arg19[%c0_44, %c0_45] : memref<1x32xf32, #tpu.memory_space<vmem>>, vector<1x32xf32>
    %c0_46 = arith.constant 0 : index
    %c0_47 = arith.constant 0 : index
    %71 = vector.load %arg20[%c0_46, %c0_47] : memref<1x32xf32, #tpu.memory_space<vmem>>, vector<1x32xf32>
    %cst_48 = arith.constant dense<0.000000e+00> : vector<8xf32>
    %72 = vector.multi_reduction <add>, %69, %cst_48 [1] : vector<8x32xf32> to vector<8xf32>
    %73 = vector.shape_cast %72 : vector<8xf32> to vector<8x1xf32>
    %74 = arith.mulf %69, %69 : vector<8x32xf32>
    %cst_49 = arith.constant dense<0.000000e+00> : vector<8xf32>
    %75 = vector.multi_reduction <add>, %74, %cst_49 [1] : vector<8x32xf32> to vector<8xf32>
    %76 = vector.shape_cast %75 : vector<8xf32> to vector<8x1xf32>
    %cst_50 = arith.constant 3.125000e-02 : f32
    %77 = vector.broadcast %cst_50 : f32 to vector<8x1xf32>
    %78 = arith.mulf %73, %77 : vector<8x1xf32>
    %cst_51 = arith.constant 3.125000e-02 : f32
    %79 = vector.broadcast %cst_51 : f32 to vector<8x1xf32>
    %80 = arith.mulf %76, %79 : vector<8x1xf32>
    %81 = arith.mulf %78, %78 : vector<8x1xf32>
    %82 = arith.subf %80, %81 : vector<8x1xf32>
    %83 = vector.broadcast %78 : vector<8x1xf32> to vector<8x32xf32>
    %84 = arith.subf %69, %83 : vector<8x32xf32>
    %cst_52 = arith.constant 9.99999974E-6 : f32
    %85 = vector.broadcast %cst_52 : f32 to vector<8x1xf32>
    %86 = arith.addf %82, %85 : vector<8x1xf32>
    %87 = math.rsqrt %86 : vector<8x1xf32>
    %88 = vector.broadcast %87 : vector<8x1xf32> to vector<8x32xf32>
    %89 = arith.mulf %84, %88 : vector<8x32xf32>
    %90 = vector.broadcast %70 : vector<1x32xf32> to vector<8x32xf32>
    %91 = arith.mulf %89, %90 : vector<8x32xf32>
    %92 = vector.broadcast %71 : vector<1x32xf32> to vector<8x32xf32>
    %93 = arith.addf %91, %92 : vector<8x32xf32>
    %c0_53 = arith.constant 0 : index
    %c0_54 = arith.constant 0 : index
    %94 = vector.load %arg21[%c0_53, %c0_54] : memref<32x128xf32, #tpu.memory_space<vmem>>, vector<32x128xf32>
    %cst_55 = arith.constant dense<0.000000e+00> : vector<8x128xf32>
    %95 = tpu.matmul %93, %94, %cst_55 {dimension_numbers = #tpu.dot_dimension_numbers<[1], [0], [0], [1], [0, 0, 1, 1], [], []>} : vector<8x32xf32>, vector<32x128xf32>, vector<8x128xf32> -> vector<8x128xf32>
    %c0_56 = arith.constant 0 : index
    %c0_57 = arith.constant 0 : index
    %96 = vector.load %arg22[%c0_56, %c0_57] : memref<1x128xf32, #tpu.memory_space<vmem>>, vector<1x128xf32>
    %97 = vector.broadcast %96 : vector<1x128xf32> to vector<8x128xf32>
    %98 = arith.addf %95, %97 : vector<8x128xf32>
    %cst_58 = arith.constant 5.000000e-01 : f32
    %99 = vector.broadcast %cst_58 : f32 to vector<8x128xf32>
    %100 = arith.mulf %99, %98 : vector<8x128xf32>
    %cst_59 = arith.constant 0.707106769 : f32
    %101 = vector.broadcast %cst_59 : f32 to vector<8x128xf32>
    %102 = arith.mulf %98, %101 : vector<8x128xf32>
    %103 = math.erf %102 : vector<8x128xf32>
    %cst_60 = arith.constant 1.000000e+00 : f32
    %104 = vector.broadcast %cst_60 : f32 to vector<8x128xf32>
    %105 = arith.addf %104, %103 : vector<8x128xf32>
    %106 = arith.mulf %100, %105 : vector<8x128xf32>
    %c0_61 = arith.constant 0 : index
    %c0_62 = arith.constant 0 : index
    %107 = vector.load %arg23[%c0_61, %c0_62] : memref<128x32xf32, #tpu.memory_space<vmem>>, vector<128x32xf32>
    %cst_63 = arith.constant dense<0.000000e+00> : vector<8x32xf32>
    %108 = tpu.matmul %106, %107, %cst_63 {dimension_numbers = #tpu.dot_dimension_numbers<[1], [0], [0], [1], [0, 0, 1, 1], [], []>} : vector<8x128xf32>, vector<128x32xf32>, vector<8x32xf32> -> vector<8x32xf32>
    %109 = arith.addf %69, %108 : vector<8x32xf32>
    %c0_64 = arith.constant 0 : index
    %c0_65 = arith.constant 0 : index
    %110 = vector.load %arg24[%c0_64, %c0_65] : memref<1x32xf32, #tpu.memory_space<vmem>>, vector<1x32xf32>
    %111 = vector.broadcast %110 : vector<1x32xf32> to vector<8x32xf32>
    %112 = arith.addf %109, %111 : vector<8x32xf32>
    %c0_66 = arith.constant 0 : index
    %c0_67 = arith.constant 0 : index
    %c0_68 = arith.constant 0 : index
    %113 = vector.load %arg25[%c0_66, %c0_67, %c0_68] : memref<1x8x32xf32, #tpu.memory_space<vmem>>, vector<1x8x32xf32>
    %114 = vector.shape_cast %113 : vector<1x8x32xf32> to vector<8x32xf32>
    %115 = vector.shape_cast %112 : vector<8x32xf32> to vector<1x8x32xf32>
    tpu.vector_store %arg25[%c0_66, %c0_67, %c0_68], %115 {strides = array<i32>} : memref<1x8x32xf32, #tpu.memory_space<vmem>>, vector<1x8x32xf32>,
    return
  }
  func.func @transform_0(%arg0: i32, %arg1: i32) -> (i32, i32, i32) {
    %c0_i32 = arith.constant 0 : i32
    %c0_i32_0 = arith.constant 0 : i32
    return %arg0, %arg1, %c0_i32 : i32, i32, i32
  }
  func.func @transform_1(%arg0: i32, %arg1: i32) -> (i32, i32, i32) {
    %c0_i32 = arith.constant 0 : i32
    %c0_i32_0 = arith.constant 0 : i32
    %c0_i32_1 = arith.constant 0 : i32
    return %arg0, %c0_i32, %c0_i32_0 : i32, i32, i32
  }
  func.func @transform_2(%arg0: i32, %arg1: i32) -> (i32, i32, i32) {
    %c0_i32 = arith.constant 0 : i32
    %c0_i32_0 = arith.constant 0 : i32
    %c0_i32_1 = arith.constant 0 : i32
    return %arg0, %c0_i32, %c0_i32_0 : i32, i32, i32
  }
  func.func @transform_3(%arg0: i32, %arg1: i32) -> (i32, i32) {
    %c0_i32 = arith.constant 0 : i32
    %c0_i32_0 = arith.constant 0 : i32
    %c0_i32_1 = arith.constant 0 : i32
    return %c0_i32, %c0_i32_0 : i32, i32
  }
  func.func @transform_4(%arg0: i32, %arg1: i32) -> (i32, i32) {
    %c0_i32 = arith.constant 0 : i32
    %c0_i32_0 = arith.constant 0 : i32
    %c0_i32_1 = arith.constant 0 : i32
    return %c0_i32, %c0_i32_0 : i32, i32
  }
  func.func @transform_5(%arg0: i32, %arg1: i32) -> (i32, i32, i32) {
    %c0_i32 = arith.constant 0 : i32
    %c0_i32_0 = arith.constant 0 : i32
    %c0_i32_1 = arith.constant 0 : i32
    %c0_i32_2 = arith.constant 0 : i32
    return %c0_i32, %c0_i32_0, %c0_i32_1 : i32, i32, i32
  }
  func.func @transform_6(%arg0: i32, %arg1: i32) -> (i32, i32, i32) {
    %c0_i32 = arith.constant 0 : i32
    %c0_i32_0 = arith.constant 0 : i32
    %c0_i32_1 = arith.constant 0 : i32
    %c0_i32_2 = arith.constant 0 : i32
    return %c0_i32, %c0_i32_0, %c0_i32_1 : i32, i32, i32
  }
  func.func @transform_7(%arg0: i32, %arg1: i32) -> (i32, i32, i32) {
    %c0_i32 = arith.constant 0 : i32
    %c0_i32_0 = arith.constant 0 : i32
    %c0_i32_1 = arith.constant 0 : i32
    %c0_i32_2 = arith.constant 0 : i32
    return %c0_i32, %c0_i32_0, %c0_i32_1 : i32, i32, i32
  }
  func.func @transform_8(%arg0: i32, %arg1: i32) -> (i32, i32, i32) {
    %c0_i32 = arith.constant 0 : i32
    %c0_i32_0 = arith.constant 0 : i32
    %c0_i32_1 = arith.constant 0 : i32
    %c0_i32_2 = arith.constant 0 : i32
    return %c0_i32, %c0_i32_0, %c0_i32_1 : i32, i32, i32
  }
  func.func @transform_9(%arg0: i32, %arg1: i32) -> (i32, i32) {
    %c0_i32 = arith.constant 0 : i32
    %c0_i32_0 = arith.constant 0 : i32
    %c0_i32_1 = arith.constant 0 : i32
    return %c0_i32, %c0_i32_0 : i32, i32
  }
  func.func @transform_10(%arg0: i32, %arg1: i32) -> (i32, i32) {
    %c0_i32 = arith.constant 0 : i32
    %c0_i32_0 = arith.constant 0 : i32
    %c0_i32_1 = arith.constant 0 : i32
    return %c0_i32, %c0_i32_0 : i32, i32
  }
  func.func @transform_11(%arg0: i32, %arg1: i32) -> (i32, i32) {
    %c0_i32 = arith.constant 0 : i32
    %c0_i32_0 = arith.constant 0 : i32
    %c0_i32_1 = arith.constant 0 : i32
    return %c0_i32, %c0_i32_0 : i32, i32
  }
  func.func @transform_12(%arg0: i32, %arg1: i32) -> (i32, i32, i32) {
    %c0_i32 = arith.constant 0 : i32
    %c0_i32_0 = arith.constant 0 : i32
    %c0_i32_1 = arith.constant 0 : i32
    %c0_i32_2 = arith.constant 0 : i32
    return %c0_i32, %c0_i32_0, %c0_i32_1 : i32, i32, i32
  }
  func.func @transform_13(%arg0: i32, %arg1: i32) -> (i32, i32, i32) {
    %c0_i32 = arith.constant 0 : i32
    %c0_i32_0 = arith.constant 0 : i32
    %c0_i32_1 = arith.constant 0 : i32
    %c0_i32_2 = arith.constant 0 : i32
    return %c0_i32, %c0_i32_0, %c0_i32_1 : i32, i32, i32
  }
  func.func @transform_14(%arg0: i32, %arg1: i32) -> (i32, i32, i32) {
    %c0_i32 = arith.constant 0 : i32
    %c0_i32_0 = arith.constant 0 : i32
    %c0_i32_1 = arith.constant 0 : i32
    %c0_i32_2 = arith.constant 0 : i32
    return %c0_i32, %c0_i32_0, %c0_i32_1 : i32, i32, i32
  }
  func.func @transform_15(%arg0: i32, %arg1: i32) -> (i32, i32, i32) {
    %c0_i32 = arith.constant 0 : i32
    %c0_i32_0 = arith.constant 0 : i32
    %c0_i32_1 = arith.constant 0 : i32
    %c0_i32_2 = arith.constant 0 : i32
    return %c0_i32, %c0_i32_0, %c0_i32_1 : i32, i32, i32
  }
  func.func @transform_16(%arg0: i32, %arg1: i32) -> (i32, i32) {
    %c0_i32 = arith.constant 0 : i32
    %c0_i32_0 = arith.constant 0 : i32
    %c0_i32_1 = arith.constant 0 : i32
    return %c0_i32, %c0_i32_0 : i32, i32
  }
  func.func @transform_17(%arg0: i32, %arg1: i32) -> (i32, i32) {
    %c0_i32 = arith.constant 0 : i32
    %c0_i32_0 = arith.constant 0 : i32
    %c0_i32_1 = arith.constant 0 : i32
    return %c0_i32, %c0_i32_0 : i32, i32
  }
  func.func @transform_18(%arg0: i32, %arg1: i32) -> (i32, i32) {
    %c0_i32 = arith.constant 0 : i32
    %c0_i32_0 = arith.constant 0 : i32
    %c0_i32_1 = arith.constant 0 : i32
    return %c0_i32, %c0_i32_0 : i32, i32
  }
  func.func @transform_19(%arg0: i32, %arg1: i32) -> (i32, i32) {
    %c0_i32 = arith.constant 0 : i32
    %c0_i32_0 = arith.constant 0 : i32
    %c0_i32_1 = arith.constant 0 : i32
    return %c0_i32, %c0_i32_0 : i32, i32
  }
  func.func @transform_20(%arg0: i32, %arg1: i32) -> (i32, i32) {
    %c0_i32 = arith.constant 0 : i32
    %c0_i32_0 = arith.constant 0 : i32
    %c0_i32_1 = arith.constant 0 : i32
    return %c0_i32, %c0_i32_0 : i32, i32
  }
  func.func @transform_21(%arg0: i32, %arg1: i32) -> (i32, i32) {
    %c0_i32 = arith.constant 0 : i32
    %c0_i32_0 = arith.constant 0 : i32
    %c0_i32_1 = arith.constant 0 : i32
    return %c0_i32, %c0_i32_0 : i32, i32
  }
  func.func @transform_22(%arg0: i32, %arg1: i32) -> (i32, i32) {
    %c0_i32 = arith.constant 0 : i32
    %c0_i32_0 = arith.constant 0 : i32
    %c0_i32_1 = arith.constant 0 : i32
    return %c0_i32, %c0_i32_0 : i32, i32
  }
  func.func @transform_23(%arg0: i32, %arg1: i32) -> (i32, i32, i32) {
    %c0_i32 = arith.constant 0 : i32
    %c0_i32_0 = arith.constant 0 : i32
    return %arg0, %arg1, %c0_i32 : i32, i32, i32
  }
}

</mosaic_0001>

<llo_original>
// kernel: tpu_custom_call.1
$region0: #{tpu_custom_call.1}
  #allocation0 [shape = 'u32[]', space=smem, size = 0x4, offset = 0x4, fixed_abs, tag = 'smem constant byte address 0x4 - core index']
  #allocation1 [shape = 'u32[144,128]{1,0:T(1,128)}', space=vmem, size = 0x12000, scoped, tag = 'internal scratch']
  #allocation2 [shape = 'f32[8,32]{1,0:T(8,128)}', space=vmem, size = 0x1000, scoped, tag = 'scratch operand']
  %s0 = inlined_call_operand.vmem [shape: f32[2,16,32], index: 0, kind: input, shape index: {}]
  %s1 = inlined_call_operand.vmem [shape: f32[2,16,32], index: 1, kind: input, shape index: {}]
  %s2 = inlined_call_operand.vmem [shape: f32[2,8,24], index: 2, kind: input, shape index: {}]
  %s3 = inlined_call_operand.vmem [shape: f32[1,32], index: 3, kind: input, shape index: {}]
  %s4 = inlined_call_operand.vmem [shape: f32[1,32], index: 4, kind: input, shape index: {}]
  %s5 = inlined_call_operand.vmem [shape: f32[4,32,8], index: 5, kind: input, shape index: {}]
  %s6 = inlined_call_operand.vmem [shape: f32[4,32,8], index: 6, kind: input, shape index: {}]
  %s7 = inlined_call_operand.vmem [shape: f32[4,32,8], index: 7, kind: input, shape index: {}]
  %s8 = inlined_call_operand.vmem [shape: f32[4,8,32], index: 8, kind: input, shape index: {}]
  %s9 = inlined_call_operand.vmem [shape: f32[1,32], index: 9, kind: input, shape index: {}]
  %s10 = inlined_call_operand.vmem [shape: f32[1,32], index: 10, kind: input, shape index: {}]
  %s11 = inlined_call_operand.vmem [shape: f32[1,32], index: 11, kind: input, shape index: {}]
  %s12 = inlined_call_operand.vmem [shape: f32[4,32,8], index: 12, kind: input, shape index: {}]
  %s13 = inlined_call_operand.vmem [shape: f32[4,24,8], index: 13, kind: input, shape index: {}]
  %s14 = inlined_call_operand.vmem [shape: f32[4,24,8], index: 14, kind: input, shape index: {}]
  %s15 = inlined_call_operand.vmem [shape: f32[4,8,32], index: 15, kind: input, shape index: {}]
  %s16 = inlined_call_operand.vmem [shape: f32[1,32], index: 16, kind: input, shape index: {}]
  %s17 = inlined_call_operand.vmem [shape: f32[1,32], index: 17, kind: input, shape index: {}]
  %s18 = inlined_call_operand.vmem [shape: f32[1,32], index: 18, kind: input, shape index: {}]
  %s19 = inlined_call_operand.vmem [shape: f32[32,128], index: 19, kind: input, shape index: {}]
  %s20 = inlined_call_operand.vmem [shape: f32[1,128], index: 20, kind: input, shape index: {}]
  %s21 = inlined_call_operand.vmem [shape: f32[128,32], index: 21, kind: input, shape index: {}]
  %s22 = inlined_call_operand.vmem [shape: f32[1,32], index: 22, kind: input, shape index: {}]
  %s23 = inlined_call_operand.hbm [shape: f32[2,16,32], index: 23, kind: output, shape index: {}]
  %s24 = sld [smem:[#allocation0]]
  $region139: #{tpu_custom_call.1} parent=0
    _
  %s26 = ssub.s32 1, %s24
  %s27 = scalar_select 0, %s26, %s24
  $region1: #{tpu_custom_call.1} parent=0
    #allocation3 [shape = 'u8[8192]{0}', space=vmem, size = 0x2000, scoped, tag = 'output window, operand 0']
    #allocation4 [shape = 's32[2]{0}', space=sflag, size = 0x8, scoped, tag = 'scoped memory for tpu_custom_call.1']
    %28 = vsyncpa [#allocation4], 0
    %s29 = scalar_lea.sflag [#allocation4], 1
    %30 = vsyncpa %s29, 0
    loop: start=0, step=1, limit=6
    $region2: #{tpu_custom_call.1} parent=1 // loop_pre_header
      _
    $region3: #{tpu_custom_call.1} parent=1 // loop_header
      %s32 = sphi 0, %s36
      %p33 = scmp.ge.s32.totalorder %s32, 6
      %s39 = sphi 0, %s51
      %s40 = sphi 0, %s47
      %s41 = sphi 0, %s39
      %s42 = sphi 0, %s40
      %s43 = sphi 0, %s41
      %s44 = sphi 0, %s42
      %s56 = sphi 0, %s58
      %s59 = sphi 0, %s56
      %s60 = sphi 0, %s59
      %s76 = sphi 0, %s60
      %s82 = sphi 0, %s84
      %s85 = sphi 0, %s82
      %s86 = sphi 0, %s85
      %s102 = sphi 0, %s86
      %s108 = sphi 0, %s110
      %s111 = sphi 0, %s108
      %s112 = sphi 0, %s111
      %s128 = sphi 0, %s112
      %s132 = sphi 0, %s132
      %s134 = sphi 0, %s132
      %s135 = sphi 0, %s134
      %s149 = sphi 0, %s135
      %s153 = sphi 0, %s153
      %s155 = sphi 0, %s153
      %s156 = sphi 0, %s155
      %s170 = sphi 0, %s156
      %s174 = sphi 0, %s174
      %s176 = sphi 0, %s174
      %s177 = sphi 0, %s176
      %s191 = sphi 0, %s177
      %s195 = sphi 0, %s195
      %s197 = sphi 0, %s195
      %s198 = sphi 0, %s197
      %s212 = sphi 0, %s198
      %s216 = sphi 0, %s216
      %s218 = sphi 0, %s216
      %s219 = sphi 0, %s218
      %s233 = sphi 0, %s219
      %s237 = sphi 0, %s237
      %s239 = sphi 0, %s237
      %s240 = sphi 0, %s239
      %s254 = sphi 0, %s240
      %s258 = sphi 0, %s258
      %s260 = sphi 0, %s258
      %s261 = sphi 0, %s260
      %s275 = sphi 0, %s261
      %s279 = sphi 0, %s279
      %s281 = sphi 0, %s279
      %s282 = sphi 0, %s281
      %s296 = sphi 0, %s282
      %s300 = sphi 0, %s300
      %s302 = sphi 0, %s300
      %s303 = sphi 0, %s302
      %s317 = sphi 0, %s303
      %s321 = sphi 0, %s321
      %s323 = sphi 0, %s321
      %s324 = sphi 0, %s323
      %s338 = sphi 0, %s324
      %s342 = sphi 0, %s342
      %s344 = sphi 0, %s342
      %s345 = sphi 0, %s344
      %s359 = sphi 0, %s345
      %s363 = sphi 0, %s363
      %s365 = sphi 0, %s363
      %s366 = sphi 0, %s365
      %s380 = sphi 0, %s366
      %s384 = sphi 0, %s384
      %s386 = sphi 0, %s384
      %s387 = sphi 0, %s386
      %s401 = sphi 0, %s387
      %s405 = sphi 0, %s405
      %s407 = sphi 0, %s405
      %s408 = sphi 0, %s407
      %s422 = sphi 0, %s408
      %s426 = sphi 0, %s426
      %s428 = sphi 0, %s426
      %s429 = sphi 0, %s428
      %s443 = sphi 0, %s429
      %s447 = sphi 0, %s447
      %s449 = sphi 0, %s447
      %s450 = sphi 0, %s449
      %s464 = sphi 0, %s450
      %s468 = sphi 0, %s468
      %s470 = sphi 0, %s468
      %s471 = sphi 0, %s470
      %s485 = sphi 0, %s471
      %s489 = sphi 0, %s489
      %s491 = sphi 0, %s489
      %s492 = sphi 0, %s491
      %s506 = sphi 0, %s492
      %s510 = sphi 0, %s510
      %s512 = sphi 0, %s510
      %s513 = sphi 0, %s512
      %s527 = sphi 0, %s513
      %s531 = sphi 0, %s531
      %s533 = sphi 0, %s531
      %s534 = sphi 0, %s533
      %s548 = sphi 0, %s534
      %s556 = sphi 0, %s558
      %s559 = sphi 0, %s556
      %s560 = sphi 0, %s559
      %s576 = sphi 0, %s560
    $region4: #{tpu_custom_call.1} parent=1 // loop_header_branch
      %35 = sbr.rel (%p33) target = $region8
    $region5: #{tpu_custom_call.1} parent=1 // loop_body
      %s37 = ssub.s32 %s32, 1
      %s38 = ssub.s32 %s32, 2
      %s45 = sadd.s32 1, %s40
      %p46 = scmp.ge.s32.totalorder %s45, 2
      %s47 = scalar_select %p46, 0, %s45
      %s48 = sadd.s32 1, %s39
      %s49 = scalar_select %p46, %s48, %s39
      %p50 = scmp.ge.s32.totalorder %s49, 2
      %s51 = scalar_select %p50, 0, %s49
      %s52 = ssub.s32 %s39, %s51
      %s53 = ssub.s32 %s40, %s47
      %s54 = sor.u32 %s52, %s53
      %p55 = scmp.eq.s32.totalorder %s54, 0
      %s57 = sadd.s32 %s56, 1
      %s58 = scalar_select %p55, %s56, %s57
      %p61 = pneg %p55
      %p62 = scmp.eq.s32.totalorder %s32, 3
      %p63 = por %p61, %p62
      %p64 = scmp.ne.s32.totalorder %s56, %s59
      %p65 = scmp.eq.s32.totalorder %s32, 0
      %p66 = por %p64, %p65
      %p67 = scmp.ne.s32.totalorder %s56, %s59
      %p68 = scmp.eq.s32.totalorder %s37, 3
      %p69 = por %p67, %p68
      %p70 = scmp.ne.s32.totalorder %s59, %s60
      %p71 = scmp.eq.s32.totalorder %s37, 0
      %p72 = por %p70, %p71
      %p73 = scmp.ne.s32.totalorder %s59, %s60
      %p74 = scmp.eq.s32.totalorder %s38, 3
      %p75 = por %p73, %p74
      %p77 = scmp.ne.s32.totalorder %s60, %s76
      %p78 = scmp.eq.s32.totalorder %s38, 0
      %p79 = por %p77, %p78
      %s80 = ssub.s32 %s39, %s51
      %p81 = scmp.eq.s32.totalorder %s80, 0
      %s83 = sadd.s32 %s82, 1
      %s84 = scalar_select %p81, %s82, %s83
      %p87 = pneg %p81
      %p88 = scmp.eq.s32.totalorder %s32, 3
      %p89 = por %p87, %p88
      %p90 = scmp.ne.s32.totalorder %s82, %s85
      %p91 = scmp.eq.s32.totalorder %s32, 0
      %p92 = por %p90, %p91
      %p93 = scmp.ne.s32.totalorder %s82, %s85
      %p94 = scmp.eq.s32.totalorder %s37, 3
      %p95 = por %p93, %p94
      %p96 = scmp.ne.s32.totalorder %s85, %s86
      %p97 = scmp.eq.s32.totalorder %s37, 0
      %p98 = por %p96, %p97
      %p99 = scmp.ne.s32.totalorder %s85, %s86
      %p100 = scmp.eq.s32.totalorder %s38, 3
      %p101 = por %p99, %p100
      %p103 = scmp.ne.s32.totalorder %s86, %s102
      %p104 = scmp.eq.s32.totalorder %s38, 0
      %p105 = por %p103, %p104
      %s106 = ssub.s32 %s39, %s51
      %p107 = scmp.eq.s32.totalorder %s106, 0
      %s109 = sadd.s32 %s108, 1
      %s110 = scalar_select %p107, %s108, %s109
      %p113 = pneg %p107
      %p114 = scmp.eq.s32.totalorder %s32, 3
      %p115 = por %p113, %p114
      %p116 = scmp.ne.s32.totalorder %s108, %s111
      %p117 = scmp.eq.s32.totalorder %s32, 0
      %p118 = por %p116, %p117
      %p119 = scmp.ne.s32.totalorder %s108, %s111
      %p120 = scmp.eq.s32.totalorder %s37, 3
      %p121 = por %p119, %p120
      %p122 = scmp.ne.s32.totalorder %s111, %s112
      %p123 = scmp.eq.s32.totalorder %s37, 0
      %p124 = por %p122, %p123
      %p125 = scmp.ne.s32.totalorder %s111, %s112
      %p126 = scmp.eq.s32.totalorder %s38, 3
      %p127 = por %p125, %p126
      %p129 = scmp.ne.s32.totalorder %s112, %s128
      %p130 = scmp.eq.s32.totalorder %s38, 0
      %p131 = por %p129, %p130
      %s133 = sadd.s32 %s132, 1
      %p136 = scmp.eq.s32.totalorder %s32, 3
      %p137 = scmp.ne.s32.totalorder %s132, %s134
      %p138 = scmp.eq.s32.totalorder %s32, 0
      %p139 = por %p137, %p138
      %p140 = scmp.ne.s32.totalorder %s132, %s134
      %p141 = scmp.eq.s32.totalorder %s37, 3
      %p142 = por %p140, %p141
      %p143 = scmp.ne.s32.totalorder %s134, %s135
      %p144 = scmp.eq.s32.totalorder %s37, 0
      %p145 = por %p143, %p144
      %p146 = scmp.ne.s32.totalorder %s134, %s135
      %p147 = scmp.eq.s32.totalorder %s38, 3
      %p148 = por %p146, %p147
      %p150 = scmp.ne.s32.totalorder %s135, %s149
      %p151 = scmp.eq.s32.totalorder %s38, 0
      %p152 = por %p150, %p151
      %s154 = sadd.s32 %s153, 1
      %p157 = scmp.eq.s32.totalorder %s32, 3
      %p158 = scmp.ne.s32.totalorder %s153, %s155
      %p159 = scmp.eq.s32.totalorder %s32, 0
      %p160 = por %p158, %p159
      %p161 = scmp.ne.s32.totalorder %s153, %s155
      %p162 = scmp.eq.s32.totalorder %s37, 3
      %p163 = por %p161, %p162
      %p164 = scmp.ne.s32.totalorder %s155, %s156
      %p165 = scmp.eq.s32.totalorder %s37, 0
      %p166 = por %p164, %p165
      %p167 = scmp.ne.s32.totalorder %s155, %s156
      %p168 = scmp.eq.s32.totalorder %s38, 3
      %p169 = por %p167, %p168
      %p171 = scmp.ne.s32.totalorder %s156, %s170
      %p172 = scmp.eq.s32.totalorder %s38, 0
      %p173 = por %p171, %p172
      %s175 = sadd.s32 %s174, 1
      %p178 = scmp.eq.s32.totalorder %s32, 3
      %p179 = scmp.ne.s32.totalorder %s174, %s176
      %p180 = scmp.eq.s32.totalorder %s32, 0
      %p181 = por %p179, %p180
      %p182 = scmp.ne.s32.totalorder %s174, %s176
      %p183 = scmp.eq.s32.totalorder %s37, 3
      %p184 = por %p182, %p183
      %p185 = scmp.ne.s32.totalorder %s176, %s177
      %p186 = scmp.eq.s32.totalorder %s37, 0
      %p187 = por %p185, %p186
      %p188 = scmp.ne.s32.totalorder %s176, %s177
      %p189 = scmp.eq.s32.totalorder %s38, 3
      %p190 = por %p188, %p189
      %p192 = scmp.ne.s32.totalorder %s177, %s191
      %p193 = scmp.eq.s32.totalorder %s38, 0
      %p194 = por %p192, %p193
      %s196 = sadd.s32 %s195, 1
      %p199 = scmp.eq.s32.totalorder %s32, 3
      %p200 = scmp.ne.s32.totalorder %s195, %s197
      %p201 = scmp.eq.s32.totalorder %s32, 0
      %p202 = por %p200, %p201
      %p203 = scmp.ne.s32.totalorder %s195, %s197
      %p204 = scmp.eq.s32.totalorder %s37, 3
      %p205 = por %p203, %p204
      %p206 = scmp.ne.s32.totalorder %s197, %s198
      %p207 = scmp.eq.s32.totalorder %s37, 0
      %p208 = por %p206, %p207
      %p209 = scmp.ne.s32.totalorder %s197, %s198
      %p210 = scmp.eq.s32.totalorder %s38, 3
      %p211 = por %p209, %p210
      %p213 = scmp.ne.s32.totalorder %s198, %s212
      %p214 = scmp.eq.s32.totalorder %s38, 0
      %p215 = por %p213, %p214
      %s217 = sadd.s32 %s216, 1
      %p220 = scmp.eq.s32.totalorder %s32, 3
      %p221 = scmp.ne.s32.totalorder %s216, %s218
      %p222 = scmp.eq.s32.totalorder %s32, 0
      %p223 = por %p221, %p222
      %p224 = scmp.ne.s32.totalorder %s216, %s218
      %p225 = scmp.eq.s32.totalorder %s37, 3
      %p226 = por %p224, %p225
      %p227 = scmp.ne.s32.totalorder %s218, %s219
      %p228 = scmp.eq.s32.totalorder %s37, 0
      %p229 = por %p227, %p228
      %p230 = scmp.ne.s32.totalorder %s218, %s219
      %p231 = scmp.eq.s32.totalorder %s38, 3
      %p232 = por %p230, %p231
      %p234 = scmp.ne.s32.totalorder %s219, %s233
      %p235 = scmp.eq.s32.totalorder %s38, 0
      %p236 = por %p234, %p235
      %s238 = sadd.s32 %s237, 1
      %p241 = scmp.eq.s32.totalorder %s32, 3
      %p242 = scmp.ne.s32.totalorder %s237, %s239
      %p243 = scmp.eq.s32.totalorder %s32, 0
      %p244 = por %p242, %p243
      %p245 = scmp.ne.s32.totalorder %s237, %s239
      %p246 = scmp.eq.s32.totalorder %s37, 3
      %p247 = por %p245, %p246
      %p248 = scmp.ne.s32.totalorder %s239, %s240
      %p249 = scmp.eq.s32.totalorder %s37, 0
      %p250 = por %p248, %p249
      %p251 = scmp.ne.s32.totalorder %s239, %s240
      %p252 = scmp.eq.s32.totalorder %s38, 3
      %p253 = por %p251, %p252
      %p255 = scmp.ne.s32.totalorder %s240, %s254
      %p256 = scmp.eq.s32.totalorder %s38, 0
      %p257 = por %p255, %p256
      %s259 = sadd.s32 %s258, 1
      %p262 = scmp.eq.s32.totalorder %s32, 3
      %p263 = scmp.ne.s32.totalorder %s258, %s260
      %p264 = scmp.eq.s32.totalorder %s32, 0
      %p265 = por %p263, %p264
      %p266 = scmp.ne.s32.totalorder %s258, %s260
      %p267 = scmp.eq.s32.totalorder %s37, 3
      %p268 = por %p266, %p267
      %p269 = scmp.ne.s32.totalorder %s260, %s261
      %p270 = scmp.eq.s32.totalorder %s37, 0
      %p271 = por %p269, %p270
      %p272 = scmp.ne.s32.totalorder %s260, %s261
      %p273 = scmp.eq.s32.totalorder %s38, 3
      %p274 = por %p272, %p273
      %p276 = scmp.ne.s32.totalorder %s261, %s275
      %p277 = scmp.eq.s32.totalorder %s38, 0
      %p278 = por %p276, %p277
      %s280 = sadd.s32 %s279, 1
      %p283 = scmp.eq.s32.totalorder %s32, 3
      %p284 = scmp.ne.s32.totalorder %s279, %s281
      %p285 = scmp.eq.s32.totalorder %s32, 0
      %p286 = por %p284, %p285
      %p287 = scmp.ne.s32.totalorder %s279, %s281
      %p288 = scmp.eq.s32.totalorder %s37, 3
      %p289 = por %p287, %p288
      %p290 = scmp.ne.s32.totalorder %s281, %s282
      %p291 = scmp.eq.s32.totalorder %s37, 0
      %p292 = por %p290, %p291
      %p293 = scmp.ne.s32.totalorder %s281, %s282
      %p294 = scmp.eq.s32.totalorder %s38, 3
      %p295 = por %p293, %p294
      %p297 = scmp.ne.s32.totalorder %s282, %s296
      %p298 = scmp.eq.s32.totalorder %s38, 0
      %p299 = por %p297, %p298
      %s301 = sadd.s32 %s300, 1
      %p304 = scmp.eq.s32.totalorder %s32, 3
      %p305 = scmp.ne.s32.totalorder %s300, %s302
      %p306 = scmp.eq.s32.totalorder %s32, 0
      %p307 = por %p305, %p306
      %p308 = scmp.ne.s32.totalorder %s300, %s302
      %p309 = scmp.eq.s32.totalorder %s37, 3
      %p310 = por %p308, %p309
      %p311 = scmp.ne.s32.totalorder %s302, %s303
      %p312 = scmp.eq.s32.totalorder %s37, 0
      %p313 = por %p311, %p312
      %p314 = scmp.ne.s32.totalorder %s302, %s303
      %p315 = scmp.eq.s32.totalorder %s38, 3
      %p316 = por %p314, %p315
      %p318 = scmp.ne.s32.totalorder %s303, %s317
      %p319 = scmp.eq.s32.totalorder %s38, 0
      %p320 = por %p318, %p319
      %s322 = sadd.s32 %s321, 1
      %p325 = scmp.eq.s32.totalorder %s32, 3
      %p326 = scmp.ne.s32.totalorder %s321, %s323
      %p327 = scmp.eq.s32.totalorder %s32, 0
      %p328 = por %p326, %p327
      %p329 = scmp.ne.s32.totalorder %s321, %s323
      %p330 = scmp.eq.s32.totalorder %s37, 3
      %p331 = por %p329, %p330
      %p332 = scmp.ne.s32.totalorder %s323, %s324
      %p333 = scmp.eq.s32.totalorder %s37, 0
      %p334 = por %p332, %p333
      %p335 = scmp.ne.s32.totalorder %s323, %s324
      %p336 = scmp.eq.s32.totalorder %s38, 3
      %p337 = por %p335, %p336
      %p339 = scmp.ne.s32.totalorder %s324, %s338
      %p340 = scmp.eq.s32.totalorder %s38, 0
      %p341 = por %p339, %p340
      %s343 = sadd.s32 %s342, 1
      %p346 = scmp.eq.s32.totalorder %s32, 3
      %p347 = scmp.ne.s32.totalorder %s342, %s344
      %p348 = scmp.eq.s32.totalorder %s32, 0
      %p349 = por %p347, %p348
      %p350 = scmp.ne.s32.totalorder %s342, %s344
      %p351 = scmp.eq.s32.totalorder %s37, 3
      %p352 = por %p350, %p351
      %p353 = scmp.ne.s32.totalorder %s344, %s345
      %p354 = scmp.eq.s32.totalorder %s37, 0
      %p355 = por %p353, %p354
      %p356 = scmp.ne.s32.totalorder %s344, %s345
      %p357 = scmp.eq.s32.totalorder %s38, 3
      %p358 = por %p356, %p357
      %p360 = scmp.ne.s32.totalorder %s345, %s359
      %p361 = scmp.eq.s32.totalorder %s38, 0
      %p362 = por %p360, %p361
      %s364 = sadd.s32 %s363, 1
      %p367 = scmp.eq.s32.totalorder %s32, 3
      %p368 = scmp.ne.s32.totalorder %s363, %s365
      %p369 = scmp.eq.s32.totalorder %s32, 0
      %p370 = por %p368, %p369
      %p371 = scmp.ne.s32.totalorder %s363, %s365
      %p372 = scmp.eq.s32.totalorder %s37, 3
      %p373 = por %p371, %p372
      %p374 = scmp.ne.s32.totalorder %s365, %s366
      %p375 = scmp.eq.s32.totalorder %s37, 0
      %p376 = por %p374, %p375
      %p377 = scmp.ne.s32.totalorder %s365, %s366
      %p378 = scmp.eq.s32.totalorder %s38, 3
      %p379 = por %p377, %p378
      %p381 = scmp.ne.s32.totalorder %s366, %s380
      %p382 = scmp.eq.s32.totalorder %s38, 0
      %p383 = por %p381, %p382
      %s385 = sadd.s32 %s384, 1
      %p388 = scmp.eq.s32.totalorder %s32, 3
      %p389 = scmp.ne.s32.totalorder %s384, %s386
      %p390 = scmp.eq.s32.totalorder %s32, 0
      %p391 = por %p389, %p390
      %p392 = scmp.ne.s32.totalorder %s384, %s386
      %p393 = scmp.eq.s32.totalorder %s37, 3
      %p394 = por %p392, %p393
      %p395 = scmp.ne.s32.totalorder %s386, %s387
      %p396 = scmp.eq.s32.totalorder %s37, 0
      %p397 = por %p395, %p396
      %p398 = scmp.ne.s32.totalorder %s386, %s387
      %p399 = scmp.eq.s32.totalorder %s38, 3
      %p400 = por %p398, %p399
      %p402 = scmp.ne.s32.totalorder %s387, %s401
      %p403 = scmp.eq.s32.totalorder %s38, 0
      %p404 = por %p402, %p403
      %s406 = sadd.s32 %s405, 1
      %p409 = scmp.eq.s32.totalorder %s32, 3
      %p410 = scmp.ne.s32.totalorder %s405, %s407
      %p411 = scmp.eq.s32.totalorder %s32, 0
      %p412 = por %p410, %p411
      %p413 = scmp.ne.s32.totalorder %s405, %s407
      %p414 = scmp.eq.s32.totalorder %s37, 3
      %p415 = por %p413, %p414
      %p416 = scmp.ne.s32.totalorder %s407, %s408
      %p417 = scmp.eq.s32.totalorder %s37, 0
      %p418 = por %p416, %p417
      %p419 = scmp.ne.s32.totalorder %s407, %s408
      %p420 = scmp.eq.s32.totalorder %s38, 3
      %p421 = por %p419, %p420
      %p423 = scmp.ne.s32.totalorder %s408, %s422
      %p424 = scmp.eq.s32.totalorder %s38, 0
      %p425 = por %p423, %p424
      %s427 = sadd.s32 %s426, 1
      %p430 = scmp.eq.s32.totalorder %s32, 3
      %p431 = scmp.ne.s32.totalorder %s426, %s428
      %p432 = scmp.eq.s32.totalorder %s32, 0
      %p433 = por %p431, %p432
      %p434 = scmp.ne.s32.totalorder %s426, %s428
      %p435 = scmp.eq.s32.totalorder %s37, 3
      %p436 = por %p434, %p435
      %p437 = scmp.ne.s32.totalorder %s428, %s429
      %p438 = scmp.eq.s32.totalorder %s37, 0
      %p439 = por %p437, %p438
      %p440 = scmp.ne.s32.totalorder %s428, %s429
      %p441 = scmp.eq.s32.totalorder %s38, 3
      %p442 = por %p440, %p441
      %p444 = scmp.ne.s32.totalorder %s429, %s443
      %p445 = scmp.eq.s32.totalorder %s38, 0
      %p446 = por %p444, %p445
      %s448 = sadd.s32 %s447, 1
      %p451 = scmp.eq.s32.totalorder %s32, 3
      %p452 = scmp.ne.s32.totalorder %s447, %s449
      %p453 = scmp.eq.s32.totalorder %s32, 0
      %p454 = por %p452, %p453
      %p455 = scmp.ne.s32.totalorder %s447, %s449
      %p456 = scmp.eq.s32.totalorder %s37, 3
      %p457 = por %p455, %p456
      %p458 = scmp.ne.s32.totalorder %s449, %s450
      %p459 = scmp.eq.s32.totalorder %s37, 0
      %p460 = por %p458, %p459
      %p461 = scmp.ne.s32.totalorder %s449, %s450
      %p462 = scmp.eq.s32.totalorder %s38, 3
      %p463 = por %p461, %p462
      %p465 = scmp.ne.s32.totalorder %s450, %s464
      %p466 = scmp.eq.s32.totalorder %s38, 0
      %p467 = por %p465, %p466
      %s469 = sadd.s32 %s468, 1
      %p472 = scmp.eq.s32.totalorder %s32, 3
      %p473 = scmp.ne.s32.totalorder %s468, %s470
      %p474 = scmp.eq.s32.totalorder %s32, 0
      %p475 = por %p473, %p474
      %p476 = scmp.ne.s32.totalorder %s468, %s470
      %p477 = scmp.eq.s32.totalorder %s37, 3
      %p478 = por %p476, %p477
      %p479 = scmp.ne.s32.totalorder %s470, %s471
      %p480 = scmp.eq.s32.totalorder %s37, 0
      %p481 = por %p479, %p480
      %p482 = scmp.ne.s32.totalorder %s470, %s471
      %p483 = scmp.eq.s32.totalorder %s38, 3
      %p484 = por %p482, %p483
      %p486 = scmp.ne.s32.totalorder %s471, %s485
      %p487 = scmp.eq.s32.totalorder %s38, 0
      %p488 = por %p486, %p487
      %s490 = sadd.s32 %s489, 1
      %p493 = scmp.eq.s32.totalorder %s32, 3
      %p494 = scmp.ne.s32.totalorder %s489, %s491
      %p495 = scmp.eq.s32.totalorder %s32, 0
      %p496 = por %p494, %p495
      %p497 = scmp.ne.s32.totalorder %s489, %s491
      %p498 = scmp.eq.s32.totalorder %s37, 3
      %p499 = por %p497, %p498
      %p500 = scmp.ne.s32.totalorder %s491, %s492
      %p501 = scmp.eq.s32.totalorder %s37, 0
      %p502 = por %p500, %p501
      %p503 = scmp.ne.s32.totalorder %s491, %s492
      %p504 = scmp.eq.s32.totalorder %s38, 3
      %p505 = por %p503, %p504
      %p507 = scmp.ne.s32.totalorder %s492, %s506
      %p508 = scmp.eq.s32.totalorder %s38, 0
      %p509 = por %p507, %p508
      %s511 = sadd.s32 %s510, 1
      %p514 = scmp.eq.s32.totalorder %s32, 3
      %p515 = scmp.ne.s32.totalorder %s510, %s512
      %p516 = scmp.eq.s32.totalorder %s32, 0
      %p517 = por %p515, %p516
      %p518 = scmp.ne.s32.totalorder %s510, %s512
      %p519 = scmp.eq.s32.totalorder %s37, 3
      %p520 = por %p518, %p519
      %p521 = scmp.ne.s32.totalorder %s512, %s513
      %p522 = scmp.eq.s32.totalorder %s37, 0
      %p523 = por %p521, %p522
      %p524 = scmp.ne.s32.totalorder %s512, %s513
      %p525 = scmp.eq.s32.totalorder %s38, 3
      %p526 = por %p524, %p525
      %p528 = scmp.ne.s32.totalorder %s513, %s527
      %p529 = scmp.eq.s32.totalorder %s38, 0
      %p530 = por %p528, %p529
      %s532 = sadd.s32 %s531, 1
      %p535 = scmp.eq.s32.totalorder %s32, 3
      %p536 = scmp.ne.s32.totalorder %s531, %s533
      %p537 = scmp.eq.s32.totalorder %s32, 0
      %p538 = por %p536, %p537
      %p539 = scmp.ne.s32.totalorder %s531, %s533
      %p540 = scmp.eq.s32.totalorder %s37, 3
      %p541 = por %p539, %p540
      %p542 = scmp.ne.s32.totalorder %s533, %s534
      %p543 = scmp.eq.s32.totalorder %s37, 0
      %p544 = por %p542, %p543
      %p545 = scmp.ne.s32.totalorder %s533, %s534
      %p546 = scmp.eq.s32.totalorder %s38, 3
      %p547 = por %p545, %p546
      %p549 = scmp.ne.s32.totalorder %s534, %s548
      %p550 = scmp.eq.s32.totalorder %s38, 0
      %p551 = por %p549, %p550
      %s552 = ssub.s32 %s39, %s51
      %s553 = ssub.s32 %s40, %s47
      %s554 = sor.u32 %s552, %s553
      %p555 = scmp.eq.s32.totalorder %s554, 0
      %s557 = sadd.s32 %s556, 1
      %s558 = scalar_select %p555, %s556, %s557
      %p561 = pneg %p555
      %p562 = scmp.eq.s32.totalorder %s32, 3
      %p563 = por %p561, %p562
      %p564 = scmp.ne.s32.totalorder %s556, %s559
      %p565 = scmp.eq.s32.totalorder %s32, 0
      %p566 = por %p564, %p565
      %p567 = scmp.ne.s32.totalorder %s556, %s559
      %p568 = scmp.eq.s32.totalorder %s37, 3
      %p569 = por %p567, %p568
      %p570 = scmp.ne.s32.totalorder %s559, %s560
      %p571 = scmp.eq.s32.totalorder %s37, 0
      %p572 = por %p570, %p571
      %p573 = scmp.ne.s32.totalorder %s559, %s560
      %p574 = scmp.eq.s32.totalorder %s38, 3
      %p575 = por %p573, %p574
      %p577 = scmp.ne.s32.totalorder %s560, %s576
      %p578 = scmp.eq.s32.totalorder %s38, 0
      %p579 = por %p577, %p578
      %p580 = scmp.le.s32.totalorder 1, %s32
      %p581 = scmp.lt.s32.totalorder %s32, 5
      %p582 = pnand %p580, %p581
      %p583 = pneg %p582
      // Predicated region
      $region9: #{tpu_custom_call.1} parent=5 // pred_check
        _
      $region10: #{tpu_custom_call.1} parent=5 // pred_check_branch
        %585 = sbr.rel (%p582) target = $region12
      $region11: #{tpu_custom_call.1} parent=5 // pred_region
        %s586 = ssub.s32 %s32, 1
        // Predicated region
        $region13: #{tpu_custom_call.1} parent=11 // pred_check
          %p587 = pneg %p145
        $region14: #{tpu_custom_call.1} parent=11 // pred_check_branch
          %589 = sbr.rel (%p587) target = $region16
        $region15: #{tpu_custom_call.1} parent=11 // pred_region
          _
        $region16: #{tpu_custom_call.1} parent=11 // pred_fallthru
          _
        // Predicated region
        $region17: #{tpu_custom_call.1} parent=11 // pred_check
          %p590 = pneg %p166
        $region18: #{tpu_custom_call.1} parent=11 // pred_check_branch
          %592 = sbr.rel (%p590) target = $region20
        $region19: #{tpu_custom_call.1} parent=11 // pred_region
          _
        $region20: #{tpu_custom_call.1} parent=11 // pred_fallthru
          _
        // Predicated region
        $region21: #{tpu_custom_call.1} parent=11 // pred_check
          %p593 = pneg %p187
        $region22: #{tpu_custom_call.1} parent=11 // pred_check_branch
          %595 = sbr.rel (%p593) target = $region24
        $region23: #{tpu_custom_call.1} parent=11 // pred_region
          _
        $region24: #{tpu_custom_call.1} parent=11 // pred_fallthru
          _
        // Predicated region
        $region25: #{tpu_custom_call.1} parent=11 // pred_check
          %p596 = pneg %p208
        $region26: #{tpu_custom_call.1} parent=11 // pred_check_branch
          %598 = sbr.rel (%p596) target = $region28
        $region27: #{tpu_custom_call.1} parent=11 // pred_region
          _
        $region28: #{tpu_custom_call.1} parent=11 // pred_fallthru
          _
        // Predicated region
        $region29: #{tpu_custom_call.1} parent=11 // pred_check
          %p599 = pneg %p229
        $region30: #{tpu_custom_call.1} parent=11 // pred_check_branch
          %601 = sbr.rel (%p599) target = $region32
        $region31: #{tpu_custom_call.1} parent=11 // pred_region
          _
        $region32: #{tpu_custom_call.1} parent=11 // pred_fallthru
          _
        // Predicated region
        $region33: #{tpu_custom_call.1} parent=11 // pred_check
          %p602 = pneg %p250
        $region34: #{tpu_custom_call.1} parent=11 // pred_check_branch
          %604 = sbr.rel (%p602) target = $region36
        $region35: #{tpu_custom_call.1} parent=11 // pred_region
          _
        $region36: #{tpu_custom_call.1} parent=11 // pred_fallthru
          _
        // Predicated region
        $region37: #{tpu_custom_call.1} parent=11 // pred_check
          %p605 = pneg %p271
        $region38: #{tpu_custom_call.1} parent=11 // pred_check_branch
          %607 = sbr.rel (%p605) target = $region40
        $region39: #{tpu_custom_call.1} parent=11 // pred_region
          _
        $region40: #{tpu_custom_call.1} parent=11 // pred_fallthru
          _
        // Predicated region
        $region41: #{tpu_custom_call.1} parent=11 // pred_check
          %p608 = pneg %p292
        $region42: #{tpu_custom_call.1} parent=11 // pred_check_branch
          %610 = sbr.rel (%p608) target = $region44
        $region43: #{tpu_custom_call.1} parent=11 // pred_region
          _
        $region44: #{tpu_custom_call.1} parent=11 // pred_fallthru
          _
        // Predicated region
        $region45: #{tpu_custom_call.1} parent=11 // pred_check
          %p611 = pneg %p313
        $region46: #{tpu_custom_call.1} parent=11 // pred_check_branch
          %613 = sbr.rel (%p611) target = $region48
        $region47: #{tpu_custom_call.1} parent=11 // pred_region
          _
        $region48: #{tpu_custom_call.1} parent=11 // pred_fallthru
          _
        // Predicated region
        $region49: #{tpu_custom_call.1} parent=11 // pred_check
          %p614 = pneg %p334
        $region50: #{tpu_custom_call.1} parent=11 // pred_check_branch
          %616 = sbr.rel (%p614) target = $region52
        $region51: #{tpu_custom_call.1} parent=11 // pred_region
          _
        $region52: #{tpu_custom_call.1} parent=11 // pred_fallthru
          _
        // Predicated region
        $region53: #{tpu_custom_call.1} parent=11 // pred_check
          %p617 = pneg %p355
        $region54: #{tpu_custom_call.1} parent=11 // pred_check_branch
          %619 = sbr.rel (%p617) target = $region56
        $region55: #{tpu_custom_call.1} parent=11 // pred_region
          _
        $region56: #{tpu_custom_call.1} parent=11 // pred_fallthru
          _
        // Predicated region
        $region57: #{tpu_custom_call.1} parent=11 // pred_check
          %p620 = pneg %p376
        $region58: #{tpu_custom_call.1} parent=11 // pred_check_branch
          %622 = sbr.rel (%p620) target = $region60
        $region59: #{tpu_custom_call.1} parent=11 // pred_region
          _
        $region60: #{tpu_custom_call.1} parent=11 // pred_fallthru
          _
        // Predicated region
        $region61: #{tpu_custom_call.1} parent=11 // pred_check
          %p623 = pneg %p397
        $region62: #{tpu_custom_call.1} parent=11 // pred_check_branch
          %625 = sbr.rel (%p623) target = $region64
        $region63: #{tpu_custom_call.1} parent=11 // pred_region
          _
        $region64: #{tpu_custom_call.1} parent=11 // pred_fallthru
          _
        // Predicated region
        $region65: #{tpu_custom_call.1} parent=11 // pred_check
          %p626 = pneg %p418
        $region66: #{tpu_custom_call.1} parent=11 // pred_check_branch
          %628 = sbr.rel (%p626) target = $region68
        $region67: #{tpu_custom_call.1} parent=11 // pred_region
          _
        $region68: #{tpu_custom_call.1} parent=11 // pred_fallthru
          _
        // Predicated region
        $region69: #{tpu_custom_call.1} parent=11 // pred_check
          %p629 = pneg %p439
        $region70: #{tpu_custom_call.1} parent=11 // pred_check_branch
          %631 = sbr.rel (%p629) target = $region72
        $region71: #{tpu_custom_call.1} parent=11 // pred_region
          _
        $region72: #{tpu_custom_call.1} parent=11 // pred_fallthru
          _
        // Predicated region
        $region73: #{tpu_custom_call.1} parent=11 // pred_check
          %p632 = pneg %p460
        $region74: #{tpu_custom_call.1} parent=11 // pred_check_branch
          %634 = sbr.rel (%p632) target = $region76
        $region75: #{tpu_custom_call.1} parent=11 // pred_region
          _
        $region76: #{tpu_custom_call.1} parent=11 // pred_fallthru
          _
        // Predicated region
        $region77: #{tpu_custom_call.1} parent=11 // pred_check
          %p635 = pneg %p481
        $region78: #{tpu_custom_call.1} parent=11 // pred_check_branch
          %637 = sbr.rel (%p635) target = $region80
        $region79: #{tpu_custom_call.1} parent=11 // pred_region
          _
        $region80: #{tpu_custom_call.1} parent=11 // pred_fallthru
          _
        // Predicated region
        $region81: #{tpu_custom_call.1} parent=11 // pred_check
          %p638 = pneg %p502
        $region82: #{tpu_custom_call.1} parent=11 // pred_check_branch
          %640 = sbr.rel (%p638) target = $region84
        $region83: #{tpu_custom_call.1} parent=11 // pred_region
          _
        $region84: #{tpu_custom_call.1} parent=11 // pred_fallthru
          _
        // Predicated region
        $region85: #{tpu_custom_call.1} parent=11 // pred_check
          %p641 = pneg %p523
        $region86: #{tpu_custom_call.1} parent=11 // pred_check_branch
          %643 = sbr.rel (%p641) target = $region88
        $region87: #{tpu_custom_call.1} parent=11 // pred_region
          _
        $region88: #{tpu_custom_call.1} parent=11 // pred_fallthru
          _
        // Predicated region
        $region89: #{tpu_custom_call.1} parent=11 // pred_check
          %p644 = pneg %p544
        $region90: #{tpu_custom_call.1} parent=11 // pred_check_branch
          %646 = sbr.rel (%p644) target = $region92
        $region91: #{tpu_custom_call.1} parent=11 // pred_region
          _
        $region92: #{tpu_custom_call.1} parent=11 // pred_fallthru
          _
      $region12: #{tpu_custom_call.1} parent=5 // pred_fallthru
        _
      %p647 = scmp.lt.s32.totalorder %s32, 4
      // Predicated region
      $region93: #{tpu_custom_call.1} parent=5 // pred_check
        %p648 = pneg %p647
      $region94: #{tpu_custom_call.1} parent=5 // pred_check_branch
        %650 = sbr.rel (%p648) target = $region96
      $region95: #{tpu_custom_call.1} parent=5 // pred_region
        // Predicated region
        $region97: #{tpu_custom_call.1} parent=95 // pred_check
          %p651 = pneg %p66
        $region98: #{tpu_custom_call.1} parent=95 // pred_check_branch
          %653 = sbr.rel (%p651) target = $region100
        $region99: #{tpu_custom_call.1} parent=95 // pred_region
          %p654 = scmp.lt.s32.totalorder %s39, 1
          %s655 = scalar_select %p654, %s39, 1
          %p656 = scmp.lt.s32.totalorder %s40, 1
          %s657 = scalar_select %p656, %s40, 1
          %s658 = smul.addr %s655, 2
          %s659 = sadd.s32 %s657, %s658
          %s660 = smul.addr %s659, 8
          %s661 = scalar_lea.vmem %s0, %s660
        $region100: #{tpu_custom_call.1} parent=95 // pred_fallthru
          _
        // Predicated region
        $region101: #{tpu_custom_call.1} parent=95 // pred_check
          %p662 = pneg %p92
        $region102: #{tpu_custom_call.1} parent=95 // pred_check_branch
          %664 = sbr.rel (%p662) target = $region104
        $region103: #{tpu_custom_call.1} parent=95 // pred_region
          %p665 = scmp.lt.s32.totalorder %s39, 1
          %s666 = scalar_select %p665, %s39, 1
          %s667 = smul.addr %s666, 2
          %s668 = smul.addr %s667, 8
          %s669 = scalar_lea.vmem %s1, %s668
        $region104: #{tpu_custom_call.1} parent=95 // pred_fallthru
          _
        // Predicated region
        $region105: #{tpu_custom_call.1} parent=95 // pred_check
          %p670 = pneg %p118
        $region106: #{tpu_custom_call.1} parent=95 // pred_check_branch
          %672 = sbr.rel (%p670) target = $region108
        $region107: #{tpu_custom_call.1} parent=95 // pred_region
          %p673 = scmp.lt.s32.totalorder %s39, 1
          %s674 = scalar_select %p673, %s39, 1
          %s675 = smul.addr %s674, 8
          %s676 = scalar_lea.vmem %s2, %s675
        $region108: #{tpu_custom_call.1} parent=95 // pred_fallthru
          _
      $region96: #{tpu_custom_call.1} parent=5 // pred_fallthru
        _
      %p677 = scmp.le.s32.totalorder 1, %s32
      %p678 = scmp.lt.s32.totalorder %s32, 5
      %p679 = pnand %p677, %p678
      %p680 = pneg %p679
      // Predicated region
      $region109: #{tpu_custom_call.1} parent=5 // pred_check
        _
      $region110: #{tpu_custom_call.1} parent=5 // pred_check_branch
        %682 = sbr.rel (%p679) target = $region112
      $region111: #{tpu_custom_call.1} parent=5 // pred_region
        %s683 = ssub.s32 %s32, 1
        %p684 = scmp.lt.s32.totalorder %s41, 1
        %s685 = scalar_select %p684, %s41, 1
        %p686 = scmp.lt.s32.totalorder %s42, 1
        %s687 = scalar_select %p686, %s42, 1
        %s688 = smul.addr %s685, 2
        %s689 = sadd.s32 %s687, %s688
        %s690 = smul.addr %s689, 8
        %s691 = scalar_lea.vmem %s0, %s690
        %p692 = pneg %p72
        %p693 = pneg %p69
        %p694 = scmp.lt.s32.totalorder %s41, 1
        %s695 = scalar_select %p694, %s41, 1
        %s696 = smul.addr %s695, 2
        %s697 = smul.addr %s696, 8
        %s698 = scalar_lea.vmem %s1, %s697
        %p699 = pneg %p98
        %p700 = pneg %p95
        %p701 = scmp.lt.s32.totalorder %s41, 1
        %s702 = scalar_select %p701, %s41, 1
        %s703 = smul.addr %s702, 8
        %s704 = scalar_lea.vmem %s2, %s703
        %p705 = pneg %p124
        %p706 = pneg %p121
        %p707 = pneg %p145
        %p708 = pneg %p142
        %p709 = pneg %p166
        %p710 = pneg %p163
        %p711 = pneg %p187
        %p712 = pneg %p184
        %p713 = pneg %p208
        %p714 = pneg %p205
        %p715 = pneg %p229
        %p716 = pneg %p226
        %p717 = pneg %p250
        %p718 = pneg %p247
        %p719 = pneg %p271
        %p720 = pneg %p268
        %p721 = pneg %p292
        %p722 = pneg %p289
        %p723 = pneg %p313
        %p724 = pneg %p310
        %p725 = pneg %p334
        %p726 = pneg %p331
        %p727 = pneg %p355
        %p728 = pneg %p352
        %p729 = pneg %p376
        %p730 = pneg %p373
        %p731 = pneg %p397
        %p732 = pneg %p394
        %p733 = pneg %p418
        %p734 = pneg %p415
        %p735 = pneg %p439
        %p736 = pneg %p436
        %p737 = pneg %p460
        %p738 = pneg %p457
        %p739 = pneg %p481
        %p740 = pneg %p478
        %p741 = pneg %p502
        %p742 = pneg %p499
        %p743 = pneg %p523
        %p744 = pneg %p520
        %p745 = pneg %p544
        %p746 = pneg %p541
        %p747 = pneg %p572
        %p748 = pneg %p569
        %s749 = sand.u32 %s559, 1
        %s750 = scalar_lea.sflag [#allocation4], %s749
        %s751 = sand.u32 %s559, 1
        %s752 = smul.addr %s751, 8
        %s753 = scalar_lea.vmem [#allocation3], %s752
        %p754 = scmp.lt.s32.totalorder %s41, 1
        %s755 = scalar_select %p754, %s41, 1
        %p756 = scmp.lt.s32.totalorder %s42, 1
        %s757 = scalar_select %p756, %s42, 1
        %s758 = smul.addr %s755, 2
        %s759 = sadd.s32 %s757, %s758
        %s760 = smul.addr %s759, 8
        %s761 = scalar_lea.vmem %s0, %s760
        %p762 = scmp.lt.s32.totalorder %s41, 1
        %s763 = scalar_select %p762, %s41, 1
        %s764 = smul.addr %s763, 2
        %s765 = smul.addr %s764, 8
        %s766 = scalar_lea.vmem %s1, %s765
        %p767 = scmp.lt.s32.totalorder %s41, 1
        %s768 = scalar_select %p767, %s41, 1
        %s769 = smul.addr %s768, 8
        %s770 = scalar_lea.vmem %s2, %s769
        %v771 = vld [vmem:[%s761] sm:$0xff]
        %v772 = vld [vmem:[%s766] sm:$0xff]
        %v773 = vld [vmem:[%s766 + $0x8] sm:$0xff]
        %v774 = vld [vmem:[%s770] sm:$0xff]
        %v775 = vld [vmem:[%s3] sm:$0x1]
        %v776 = vld [vmem:[%s4] sm:$0x1]
        %vm777 = vcmask 261120
        %v778 = vsel %vm777, %v771, 0.0
        %779 = vadd.xlane.f32.xlu0 %v778
        %v780 = vpop.xlane.xlu0 %779
        %v781 = vmul.f32 %v771, %v771
        %v782 = vsel %vm777, %v781, 0.0
        %783 = vadd.xlane.f32.xlu0 %v782
        %v784 = vpop.xlane.xlu0 %783
        %v785 = vmul.f32 %v780, 0.03125
        %v786 = vmul.f32 %v784, 0.03125
        %v787 = vmul.f32 %v785, %v785
        %v788 = vsub.f32 %v786, %v787
        %v789 = vsub.f32 %v771, %v785
        %v790 = vadd.f32 %v788, 1e-05
        %v791 = vrsqrt.pop %v790
        %v792 = vmul.f32 %v789, %v791
        %v794 = vlaneseq
        %v795 = vshrl.u32 %v794, 7
        %v796 = vsub.s32 0, %v795
        %v797 = vrot.slane %v775, %v796
        %v799 = vmul.f32 %v792, %v797
        %v801 = vlaneseq
        %v802 = vshrl.u32 %v801, 7
        %v803 = vsub.s32 0, %v802
        %v804 = vrot.slane %v776, %v803
        %v806 = vadd.f32 %v799, %v804
        %v807 = vld [vmem:[%s9] sm:$0x1]
        %808 = vst.msk [vmem:[#allocation2] sm:$0xff] %vm777, 0.0
        loop: start=0, step=1, limit=4
        $region113: #{tpu_custom_call.1} parent=111 // loop_pre_header
          _
        $region114: #{tpu_custom_call.1} parent=111 // loop_header
          %s810 = sphi 0, %s814
          %p811 = scmp.ge.s32.totalorder %s810, 4
        $region115: #{tpu_custom_call.1} parent=111 // loop_header_branch
          %813 = sbr.rel (%p811) target = $region119
        $region116: #{tpu_custom_call.1} parent=111 // loop_body
          %s815 = smul.u32 %s810, 32
          %s816 = scalar_lea.vmem %s5, %s815
          %v817 = vld [vmem:[%s816] sm:$0xff]
          %v818 = vld [vmem:[%s816 + $0x8] sm:$0xff]
          %v819 = vld [vmem:[%s816 + $0x10] sm:$0xff]
          %v820 = vld [vmem:[%s816 + $0x18] sm:$0xff]
          %v822 = vsel %vm777, %v806, 0
          %824 = vmatprep.subr.mxu0 0.0
          %825 = vmatpush1.msra.mxu0 0.0
          %826 = vmatprep.subr.mxu0 0.0
          %827 = vmatpush1.msra.mxu0 0.0
          %828 = vmatprep.subr.mxu0 0.0
          %829 = vmatpush1.msra.mxu0 0.0
          %830 = vmatprep.subr.mxu0 0.0
          %831 = vmatpush1.msra.mxu0 0.0
          %832 = vmatprep.subr.mxu0 0.0
          %833 = vmatpush1.msra.mxu0 0.0
          %834 = vmatprep.subr.mxu0 0.0
          %835 = vmatpush1.msra.mxu0 0.0
          %836 = vmatprep.subr.mxu0 0.0
          %837 = vmatpush1.msra.mxu0 0.0
          %838 = vmatprep.subr.mxu0 0.0
          %839 = vmatpush1.msra.mxu0 0.0
          %840 = vmatprep.subr.mxu0 0.0
          %841 = vmatpush1.msra.mxu0 0.0
          %842 = vmatprep.subr.mxu0 0.0
          %843 = vmatpush1.msra.mxu0 0.0
          %844 = vmatprep.subr.mxu0 0.0
          %845 = vmatpush1.msra.mxu0 0.0
          %846 = vmatprep.subr.mxu0 0.0
          %847 = vmatpush1.msra.mxu0 0.0
          %848 = vmatprep.subr.mxu0 0.0
          %849 = vmatpush1.msra.mxu0 %v820
          %850 = vmatprep.subr.mxu0 0.0
          %851 = vmatpush1.msra.mxu0 %v819
          %852 = vmatprep.subr.mxu0 0.0
          %853 = vmatpush1.msra.mxu0 %v818
          %854 = vmatprep.subr.mxu0 0.0
          %855 = vmatpush1.msra.mxu0 %v817
          %856 = vmatprep.subr.mxu0 0.0
          %857 = vmatpush2.msra.mxu0 0.0
          %858 = vmatprep.subr.mxu0 0.0
          %859 = vmatpush2.msra.mxu0 0.0
          %860 = vmatprep.subr.mxu0 0.0
          %861 = vmatpush2.msra.mxu0 0.0
          %862 = vmatprep.subr.mxu0 0.0
          %863 = vmatpush2.msra.mxu0 0.0
          %864 = vmatprep.subr.mxu0 0.0
          %865 = vmatpush2.msra.mxu0 0.0
          %866 = vmatprep.subr.mxu0 0.0
          %867 = vmatpush2.msra.mxu0 0.0
          %868 = vmatprep.subr.mxu0 0.0
          %869 = vmatpush2.msra.mxu0 0.0
          %870 = vmatprep.subr.mxu0 0.0
          %871 = vmatpush2.msra.mxu0 0.0
          %872 = vmatprep.subr.mxu0 0.0
          %873 = vmatpush2.msra.mxu0 0.0
          %874 = vmatprep.subr.mxu0 0.0
          %875 = vmatpush2.msra.mxu0 0.0
          %876 = vmatprep.subr.mxu0 0.0
          %877 = vmatpush2.msra.mxu0 0.0
          %878 = vmatprep.subr.mxu0 0.0
          %879 = vmatpush2.msra.mxu0 0.0
          %880 = vmatprep.subr.mxu0 0.0
          %881 = vmatpush2.msra.mxu0 0.0
          %882 = vmatprep.subr.mxu0 0.0
          %883 = vmatpush2.msra.mxu0 0.0
          %884 = vmatprep.subr.mxu0 0.0
          %885 = vmatpush2.msra.mxu0 0.0
          %886 = vmatprep.subr.mxu0 0.0
          %887 = vmatpush2.msra.mxu0 0.0
          %888 = vmatprep.mubr.f32.mxu0 0.0
          %889 = vmatmul.mubr.f32.gmra.mxu0 %v822
          %v890 = vpop.f32.mrf.mxu0
          %v891 = vadd.f32 0.0, %v890
          %v892 = vpop.f32.mrf.mxu0
          %893 = vdwg.mxu0
          %s894 = scalar_lea.vmem %s6, %s815
          %v895 = vld [vmem:[%s894] sm:$0xff]
          %v896 = vld [vmem:[%s894 + $0x8] sm:$0xff]
          %v897 = vld [vmem:[%s894 + $0x10] sm:$0xff]
          %v898 = vld [vmem:[%s894 + $0x18] sm:$0xff]
          %v900 = vsel %vm777, %v772, 0
          %v903 = vsel %vm777, %v773, 0
          %905 = vmatprep.subr.mxu0 0.0
          %906 = vmatpush1.msra.mxu0 0.0
          %907 = vmatprep.subr.mxu0 0.0
          %908 = vmatpush1.msra.mxu0 0.0
          %909 = vmatprep.subr.mxu0 0.0
          %910 = vmatpush1.msra.mxu0 0.0
          %911 = vmatprep.subr.mxu0 0.0
          %912 = vmatpush1.msra.mxu0 0.0
          %913 = vmatprep.subr.mxu0 0.0
          %914 = vmatpush1.msra.mxu0 0.0
          %915 = vmatprep.subr.mxu0 0.0
          %916 = vmatpush1.msra.mxu0 0.0
          %917 = vmatprep.subr.mxu0 0.0
          %918 = vmatpush1.msra.mxu0 0.0
          %919 = vmatprep.subr.mxu0 0.0
          %920 = vmatpush1.msra.mxu0 0.0
          %921 = vmatprep.subr.mxu0 0.0
          %922 = vmatpush1.msra.mxu0 0.0
          %923 = vmatprep.subr.mxu0 0.0
          %924 = vmatpush1.msra.mxu0 0.0
          %925 = vmatprep.subr.mxu0 0.0
          %926 = vmatpush1.msra.mxu0 0.0
          %927 = vmatprep.subr.mxu0 0.0
          %928 = vmatpush1.msra.mxu0 0.0
          %929 = vmatprep.subr.mxu0 0.0
          %930 = vmatpush1.msra.mxu0 %v898
          %931 = vmatprep.subr.mxu0 0.0
          %932 = vmatpush1.msra.mxu0 %v897
          %933 = vmatprep.subr.mxu0 0.0
          %934 = vmatpush1.msra.mxu0 %v896
          %935 = vmatprep.subr.mxu0 0.0
          %936 = vmatpush1.msra.mxu0 %v895
          %937 = vmatprep.subr.mxu0 0.0
          %938 = vmatpush2.msra.mxu0 0.0
          %939 = vmatprep.subr.mxu0 0.0
          %940 = vmatpush2.msra.mxu0 0.0
          %941 = vmatprep.subr.mxu0 0.0
          %942 = vmatpush2.msra.mxu0 0.0
          %943 = vmatprep.subr.mxu0 0.0
          %944 = vmatpush2.msra.mxu0 0.0
          %945 = vmatprep.subr.mxu0 0.0
          %946 = vmatpush2.msra.mxu0 0.0
          %947 = vmatprep.subr.mxu0 0.0
          %948 = vmatpush2.msra.mxu0 0.0
          %949 = vmatprep.subr.mxu0 0.0
          %950 = vmatpush2.msra.mxu0 0.0
          %951 = vmatprep.subr.mxu0 0.0
          %952 = vmatpush2.msra.mxu0 0.0
          %953 = vmatprep.subr.mxu0 0.0
          %954 = vmatpush2.msra.mxu0 0.0
          %955 = vmatprep.subr.mxu0 0.0
          %956 = vmatpush2.msra.mxu0 0.0
          %957 = vmatprep.subr.mxu0 0.0
          %958 = vmatpush2.msra.mxu0 0.0
          %959 = vmatprep.subr.mxu0 0.0
          %960 = vmatpush2.msra.mxu0 0.0
          %961 = vmatprep.subr.mxu0 0.0
          %962 = vmatpush2.msra.mxu0 0.0
          %963 = vmatprep.subr.mxu0 0.0
          %964 = vmatpush2.msra.mxu0 0.0
          %965 = vmatprep.subr.mxu0 0.0
          %966 = vmatpush2.msra.mxu0 0.0
          %967 = vmatprep.subr.mxu0 0.0
          %968 = vmatpush2.msra.mxu0 0.0
          %969 = vmatprep.mubr.f32.mxu0 0.0
          %970 = vmatmul.mubr.f32.gmra.mxu0 %v900
          %v971 = vpop.f32.mrf.mxu0
          %v972 = vadd.f32 0.0, %v971
          %v973 = vpop.f32.mrf.mxu0
          %974 = vmatprep.mubr.f32.mxu0 0.0
          %975 = vmatmul.mubr.f32.gmra.mxu0 %v903
          %v976 = vpop.f32.mrf.mxu0
          %v977 = vadd.f32 0.0, %v976
          %v978 = vpop.f32.mrf.mxu0
          %979 = vdwg.mxu0
          %s980 = scalar_lea.vmem %s7, %s815
          %v981 = vld [vmem:[%s980] sm:$0xff]
          %v982 = vld [vmem:[%s980 + $0x8] sm:$0xff]
          %v983 = vld [vmem:[%s980 + $0x10] sm:$0xff]
          %v984 = vld [vmem:[%s980 + $0x18] sm:$0xff]
          %985 = vmatprep.subr.mxu0 0.0
          %986 = vmatpush1.msra.mxu0 0.0
          %987 = vmatprep.subr.mxu0 0.0
          %988 = vmatpush1.msra.mxu0 0.0
          %989 = vmatprep.subr.mxu0 0.0
          %990 = vmatpush1.msra.mxu0 0.0
          %991 = vmatprep.subr.mxu0 0.0
          %992 = vmatpush1.msra.mxu0 0.0
          %993 = vmatprep.subr.mxu0 0.0
          %994 = vmatpush1.msra.mxu0 0.0
          %995 = vmatprep.subr.mxu0 0.0
          %996 = vmatpush1.msra.mxu0 0.0
          %997 = vmatprep.subr.mxu0 0.0
          %998 = vmatpush1.msra.mxu0 0.0
          %999 = vmatprep.subr.mxu0 0.0
          %1000 = vmatpush1.msra.mxu0 0.0
          %1001 = vmatprep.subr.mxu0 0.0
          %1002 = vmatpush1.msra.mxu0 0.0
          %1003 = vmatprep.subr.mxu0 0.0
          %1004 = vmatpush1.msra.mxu0 0.0
          %1005 = vmatprep.subr.mxu0 0.0
          %1006 = vmatpush1.msra.mxu0 0.0
          %1007 = vmatprep.subr.mxu0 0.0
          %1008 = vmatpush1.msra.mxu0 0.0
          %1009 = vmatprep.subr.mxu0 0.0
          %1010 = vmatpush1.msra.mxu0 %v984
          %1011 = vmatprep.subr.mxu0 0.0
          %1012 = vmatpush1.msra.mxu0 %v983
          %1013 = vmatprep.subr.mxu0 0.0
          %1014 = vmatpush1.msra.mxu0 %v982
          %1015 = vmatprep.subr.mxu0 0.0
          %1016 = vmatpush1.msra.mxu0 %v981
          %1017 = vmatprep.subr.mxu0 0.0
          %1018 = vmatpush2.msra.mxu0 0.0
          %1019 = vmatprep.subr.mxu0 0.0
          %1020 = vmatpush2.msra.mxu0 0.0
          %1021 = vmatprep.subr.mxu0 0.0
          %1022 = vmatpush2.msra.mxu0 0.0
          %1023 = vmatprep.subr.mxu0 0.0
          %1024 = vmatpush2.msra.mxu0 0.0
          %1025 = vmatprep.subr.mxu0 0.0
          %1026 = vmatpush2.msra.mxu0 0.0
          %1027 = vmatprep.subr.mxu0 0.0
          %1028 = vmatpush2.msra.mxu0 0.0
          %1029 = vmatprep.subr.mxu0 0.0
          %1030 = vmatpush2.msra.mxu0 0.0
          %1031 = vmatprep.subr.mxu0 0.0
          %1032 = vmatpush2.msra.mxu0 0.0
          %1033 = vmatprep.subr.mxu0 0.0
          %1034 = vmatpush2.msra.mxu0 0.0
          %1035 = vmatprep.subr.mxu0 0.0
          %1036 = vmatpush2.msra.mxu0 0.0
          %1037 = vmatprep.subr.mxu0 0.0
          %1038 = vmatpush2.msra.mxu0 0.0
          %1039 = vmatprep.subr.mxu0 0.0
          %1040 = vmatpush2.msra.mxu0 0.0
          %1041 = vmatprep.subr.mxu0 0.0
          %1042 = vmatpush2.msra.mxu0 0.0
          %1043 = vmatprep.subr.mxu0 0.0
          %1044 = vmatpush2.msra.mxu0 0.0
          %1045 = vmatprep.subr.mxu0 0.0
          %1046 = vmatpush2.msra.mxu0 0.0
          %1047 = vmatprep.subr.mxu0 0.0
          %1048 = vmatpush2.msra.mxu0 0.0
          %1049 = vmatprep.mubr.f32.mxu0 0.0
          %1050 = vmatmul.mubr.f32.gmra.mxu0 %v900
          %v1051 = vpop.f32.mrf.mxu0
          %v1052 = vadd.f32 0.0, %v1051
          %v1053 = vpop.f32.mrf.mxu0
          %1054 = vmatprep.mubr.f32.mxu0 0.0
          %1055 = vmatmul.mubr.f32.gmra.mxu0 %v903
          %v1056 = vpop.f32.mrf.mxu0
          %v1057 = vadd.f32 0.0, %v1056
          %v1058 = vpop.f32.mrf.mxu0
          %1059 = vdwg.mxu0
          %vm1060 = vcmask 64512
          %v1062 = vsel %vm1060, %v891, 0
          %v1065 = vsel %vm1060, %v972, 0
          %v1068 = vsel %vm1060, %v977, 0
          %1070 = vmatprep.subr.mxu0 0.0
          %1071 = vmatpush1.xpose.msra.mxu0 0.0
          %1072 = vmatprep.subr.mxu0 0.0
          %1073 = vmatpush1.xpose.msra.mxu0 0.0
          %1074 = vmatprep.subr.mxu0 0.0
          %1075 = vmatpush1.xpose.msra.mxu0 0.0
          %1076 = vmatprep.subr.mxu0 0.0
          %1077 = vmatpush1.xpose.msra.mxu0 0.0
          %1078 = vmatprep.subr.mxu0 0.0
          %1079 = vmatpush1.xpose.msra.mxu0 0.0
          %1080 = vmatprep.subr.mxu0 0.0
          %1081 = vmatpush1.xpose.msra.mxu0 0.0
          %1082 = vmatprep.subr.mxu0 0.0
          %1083 = vmatpush1.xpose.msra.mxu0 0.0
          %1084 = vmatprep.subr.mxu0 0.0
          %1085 = vmatpush1.xpose.msra.mxu0 0.0
          %1086 = vmatprep.subr.mxu0 0.0
          %1087 = vmatpush1.xpose.msra.mxu0 0.0
          %1088 = vmatprep.subr.mxu0 0.0
          %1089 = vmatpush1.xpose.msra.mxu0 0.0
          %1090 = vmatprep.subr.mxu0 0.0
          %1091 = vmatpush1.xpose.msra.mxu0 0.0
          %1092 = vmatprep.subr.mxu0 0.0
          %1093 = vmatpush1.xpose.msra.mxu0 0.0
          %1094 = vmatprep.subr.mxu0 0.0
          %1095 = vmatpush1.xpose.msra.mxu0 0.0
          %1096 = vmatprep.subr.mxu0 0.0
          %1097 = vmatpush1.xpose.msra.mxu0 0.0
          %1098 = vmatprep.subr.mxu0 0.0
          %1099 = vmatpush1.xpose.msra.mxu0 %v1068
          %1100 = vmatprep.subr.mxu0 0.0
          %1101 = vmatpush1.xpose.msra.mxu0 %v1065
          %1102 = vmatprep.subr.mxu0 0.0
          %1103 = vmatpush2.xpose.msra.mxu0 0.0
          %1104 = vmatprep.subr.mxu0 0.0
          %1105 = vmatpush2.xpose.msra.mxu0 0.0
          %1106 = vmatprep.subr.mxu0 0.0
          %1107 = vmatpush2.xpose.msra.mxu0 0.0
          %1108 = vmatprep.subr.mxu0 0.0
          %1109 = vmatpush2.xpose.msra.mxu0 0.0
          %1110 = vmatprep.subr.mxu0 0.0
          %1111 = vmatpush2.xpose.msra.mxu0 0.0
          %1112 = vmatprep.subr.mxu0 0.0
          %1113 = vmatpush2.xpose.msra.mxu0 0.0
          %1114 = vmatprep.subr.mxu0 0.0
          %1115 = vmatpush2.xpose.msra.mxu0 0.0
          %1116 = vmatprep.subr.mxu0 0.0
          %1117 = vmatpush2.xpose.msra.mxu0 0.0
          %1118 = vmatprep.subr.mxu0 0.0
          %1119 = vmatpush2.xpose.msra.mxu0 0.0
          %1120 = vmatprep.subr.mxu0 0.0
          %1121 = vmatpush2.xpose.msra.mxu0 0.0
          %1122 = vmatprep.subr.mxu0 0.0
          %1123 = vmatpush2.xpose.msra.mxu0 0.0
          %1124 = vmatprep.subr.mxu0 0.0
          %1125 = vmatpush2.xpose.msra.mxu0 0.0
          %1126 = vmatprep.subr.mxu0 0.0
          %1127 = vmatpush2.xpose.msra.mxu0 0.0
          %1128 = vmatprep.subr.mxu0 0.0
          %1129 = vmatpush2.xpose.msra.mxu0 0.0
          %1130 = vmatprep.subr.mxu0 0.0
          %1131 = vmatpush2.xpose.msra.mxu0 0.0
          %1132 = vmatprep.subr.mxu0 0.0
          %1133 = vmatpush2.xpose.msra.mxu0 0.0
          %1134 = vmatprep.mubr.f32.mxu0 0.0
          %1135 = vmatmul.mubr.f32.gmra.mxu0 %v1062
          %v1136 = vpop.f32.mrf.mxu0
          %v1137 = vadd.f32 0.0, %v1136
          %v1138 = vpop.f32.mrf.mxu0
          %1139 = vdwg.mxu0
          %vm1140 = vcmask 130048
          %v1141 = vsel %vm1140, %v1137, -inf
          %1142 = vmax.xlane.f32.xlu0 %v1141
          %v1143 = vpop.xlane.xlu0 %1142
          %v1144 = vsub.f32 %v1137, %v1143
          %v1145 = vmul.f32 %v1144, 1.442695
          %v1146 = vpow.pop %v1145
          %v1147 = vsel %vm1140, %v1146, 0.0
          %1148 = vadd.xlane.f32.xlu0 %v1147
          %v1149 = vpop.xlane.xlu0 %1148
          %v1150 = vrcp.pop %v1149
          %v1151 = vmul.f32 %v1146, %v1150
          %v1153 = vsel %vm1140, %v1151, 0
          %1155 = vmatprep.subr.mxu0 0.0
          %1156 = vmatpush1.msra.mxu0 0.0
          %1157 = vmatprep.subr.mxu0 0.0
          %1158 = vmatpush1.msra.mxu0 0.0
          %1159 = vmatprep.subr.mxu0 0.0
          %1160 = vmatpush1.msra.mxu0 0.0
          %1161 = vmatprep.subr.mxu0 0.0
          %1162 = vmatpush1.msra.mxu0 0.0
          %1163 = vmatprep.subr.mxu0 0.0
          %1164 = vmatpush1.msra.mxu0 0.0
          %1165 = vmatprep.subr.mxu0 0.0
          %1166 = vmatpush1.msra.mxu0 0.0
          %1167 = vmatprep.subr.mxu0 0.0
          %1168 = vmatpush1.msra.mxu0 0.0
          %1169 = vmatprep.subr.mxu0 0.0
          %1170 = vmatpush1.msra.mxu0 0.0
          %1171 = vmatprep.subr.mxu0 0.0
          %1172 = vmatpush1.msra.mxu0 0.0
          %1173 = vmatprep.subr.mxu0 0.0
          %1174 = vmatpush1.msra.mxu0 0.0
          %1175 = vmatprep.subr.mxu0 0.0
          %1176 = vmatpush1.msra.mxu0 0.0
          %1177 = vmatprep.subr.mxu0 0.0
          %1178 = vmatpush1.msra.mxu0 0.0
          %1179 = vmatprep.subr.mxu0 0.0
          %1180 = vmatpush1.msra.mxu0 0.0
          %1181 = vmatprep.subr.mxu0 0.0
          %1182 = vmatpush1.msra.mxu0 0.0
          %1183 = vmatprep.subr.mxu0 0.0
          %1184 = vmatpush1.msra.mxu0 %v1057
          %1185 = vmatprep.subr.mxu0 0.0
          %1186 = vmatpush1.msra.mxu0 %v1052
          %1187 = vmatprep.subr.mxu0 0.0
          %1188 = vmatpush2.msra.mxu0 0.0
          %1189 = vmatprep.subr.mxu0 0.0
          %1190 = vmatpush2.msra.mxu0 0.0
          %1191 = vmatprep.subr.mxu0 0.0
          %1192 = vmatpush2.msra.mxu0 0.0
          %1193 = vmatprep.subr.mxu0 0.0
          %1194 = vmatpush2.msra.mxu0 0.0
          %1195 = vmatprep.subr.mxu0 0.0
          %1196 = vmatpush2.msra.mxu0 0.0
          %1197 = vmatprep.subr.mxu0 0.0
          %1198 = vmatpush2.msra.mxu0 0.0
          %1199 = vmatprep.subr.mxu0 0.0
          %1200 = vmatpush2.msra.mxu0 0.0
          %1201 = vmatprep.subr.mxu0 0.0
          %1202 = vmatpush2.msra.mxu0 0.0
          %1203 = vmatprep.subr.mxu0 0.0
          %1204 = vmatpush2.msra.mxu0 0.0
          %1205 = vmatprep.subr.mxu0 0.0
          %1206 = vmatpush2.msra.mxu0 0.0
          %1207 = vmatprep.subr.mxu0 0.0
          %1208 = vmatpush2.msra.mxu0 0.0
          %1209 = vmatprep.subr.mxu0 0.0
          %1210 = vmatpush2.msra.mxu0 0.0
          %1211 = vmatprep.subr.mxu0 0.0
          %1212 = vmatpush2.msra.mxu0 0.0
          %1213 = vmatprep.subr.mxu0 0.0
          %1214 = vmatpush2.msra.mxu0 0.0
          %1215 = vmatprep.subr.mxu0 0.0
          %1216 = vmatpush2.msra.mxu0 0.0
          %1217 = vmatprep.subr.mxu0 0.0
          %1218 = vmatpush2.msra.mxu0 0.0
          %1219 = vmatprep.mubr.f32.mxu0 0.0
          %1220 = vmatmul.mubr.f32.gmra.mxu0 %v1153
          %v1221 = vpop.f32.mrf.mxu0
          %v1222 = vadd.f32 0.0, %v1221
          %v1223 = vpop.f32.mrf.mxu0
          %1224 = vdwg.mxu0
          %v1225 = vld [vmem:[#allocation2] sm:$0xff]
          %s1226 = smul.u32 %s810, 8
          %s1227 = scalar_lea.vmem %s8, %s1226
          %v1228 = vld [vmem:[%s1227] sm:$0xff]
          %v1230 = vsel %vm1060, %v1222, 0
          %1232 = vmatprep.subr.mxu0 0.0
          %1233 = vmatpush1.msra.mxu0 0.0
          %1234 = vmatprep.subr.mxu0 0.0
          %1235 = vmatpush1.msra.mxu0 0.0
          %1236 = vmatprep.subr.mxu0 0.0
          %1237 = vmatpush1.msra.mxu0 0.0
          %1238 = vmatprep.subr.mxu0 0.0
          %1239 = vmatpush1.msra.mxu0 0.0
          %1240 = vmatprep.subr.mxu0 0.0
          %1241 = vmatpush1.msra.mxu0 0.0
          %1242 = vmatprep.subr.mxu0 0.0
          %1243 = vmatpush1.msra.mxu0 0.0
          %1244 = vmatprep.subr.mxu0 0.0
          %1245 = vmatpush1.msra.mxu0 0.0
          %1246 = vmatprep.subr.mxu0 0.0
          %1247 = vmatpush1.msra.mxu0 0.0
          %1248 = vmatprep.subr.mxu0 0.0
          %1249 = vmatpush1.msra.mxu0 0.0
          %1250 = vmatprep.subr.mxu0 0.0
          %1251 = vmatpush1.msra.mxu0 0.0
          %1252 = vmatprep.subr.mxu0 0.0
          %1253 = vmatpush1.msra.mxu0 0.0
          %1254 = vmatprep.subr.mxu0 0.0
          %1255 = vmatpush1.msra.mxu0 0.0
          %1256 = vmatprep.subr.mxu0 0.0
          %1257 = vmatpush1.msra.mxu0 0.0
          %1258 = vmatprep.subr.mxu0 0.0
          %1259 = vmatpush1.msra.mxu0 0.0
          %1260 = vmatprep.subr.mxu0 0.0
          %1261 = vmatpush1.msra.mxu0 0.0
          %1262 = vmatprep.subr.mxu0 0.0
          %1263 = vmatpush1.msra.mxu0 %v1228
          %1264 = vmatprep.subr.mxu0 0.0
          %1265 = vmatpush2.msra.mxu0 0.0
          %1266 = vmatprep.subr.mxu0 0.0
          %1267 = vmatpush2.msra.mxu0 0.0
          %1268 = vmatprep.subr.mxu0 0.0
          %1269 = vmatpush2.msra.mxu0 0.0
          %1270 = vmatprep.subr.mxu0 0.0
          %1271 = vmatpush2.msra.mxu0 0.0
          %1272 = vmatprep.subr.mxu0 0.0
          %1273 = vmatpush2.msra.mxu0 0.0
          %1274 = vmatprep.subr.mxu0 0.0
          %1275 = vmatpush2.msra.mxu0 0.0
          %1276 = vmatprep.subr.mxu0 0.0
          %1277 = vmatpush2.msra.mxu0 0.0
          %1278 = vmatprep.subr.mxu0 0.0
          %1279 = vmatpush2.msra.mxu0 0.0
          %1280 = vmatprep.subr.mxu0 0.0
          %1281 = vmatpush2.msra.mxu0 0.0
          %1282 = vmatprep.subr.mxu0 0.0
          %1283 = vmatpush2.msra.mxu0 0.0
          %1284 = vmatprep.subr.mxu0 0.0
          %1285 = vmatpush2.msra.mxu0 0.0
          %1286 = vmatprep.subr.mxu0 0.0
          %1287 = vmatpush2.msra.mxu0 0.0
          %1288 = vmatprep.subr.mxu0 0.0
          %1289 = vmatpush2.msra.mxu0 0.0
          %1290 = vmatprep.subr.mxu0 0.0
          %1291 = vmatpush2.msra.mxu0 0.0
          %1292 = vmatprep.subr.mxu0 0.0
          %1293 = vmatpush2.msra.mxu0 0.0
          %1294 = vmatprep.subr.mxu0 0.0
          %1295 = vmatpush2.msra.mxu0 0.0
          %1296 = vmatprep.mubr.f32.mxu0 0.0
          %1297 = vmatmul.mubr.f32.gmra.mxu0 %v1230
          %v1298 = vpop.f32.mrf.mxu0
          %v1299 = vadd.f32 0.0, %v1298
          %v1300 = vpop.f32.mrf.mxu0
          %1301 = vdwg.mxu0
          %v1302 = vadd.f32 %v1225, %v1299
          %1303 = vst.msk [vmem:[#allocation2] sm:$0xff] %vm777, %v1302
        $region117: #{tpu_custom_call.1} parent=111 // loop_footer
          %s814 = sadd.s32 1, %s810
        $region118: #{tpu_custom_call.1} parent=111 // loop_footer_branch
          %809 = sbr.rel target = $region114
        $region119: #{tpu_custom_call.1} parent=111 // loop_exit
          _
        %v1304 = vld [vmem:[#allocation2] sm:$0xff]
        %v1306 = vlaneseq
        %v1307 = vshrl.u32 %v1306, 7
        %v1308 = vsub.s32 0, %v1307
        %v1309 = vrot.slane %v807, %v1308
        %v1311 = vadd.f32 %v1304, %v1309
        %v1312 = vadd.f32 %v771, %v1311
        %v1313 = vld [vmem:[%s10] sm:$0x1]
        %v1314 = vld [vmem:[%s11] sm:$0x1]
        %v1315 = vsel %vm777, %v1312, 0.0
        %1316 = vadd.xlane.f32.xlu0 %v1315
        %v1317 = vpop.xlane.xlu0 %1316
        %v1318 = vmul.f32 %v1312, %v1312
        %v1319 = vsel %vm777, %v1318, 0.0
        %1320 = vadd.xlane.f32.xlu0 %v1319
        %v1321 = vpop.xlane.xlu0 %1320
        %v1322 = vmul.f32 %v1317, 0.03125
        %v1323 = vmul.f32 %v1321, 0.03125
        %v1324 = vmul.f32 %v1322, %v1322
        %v1325 = vsub.f32 %v1323, %v1324
        %v1326 = vsub.f32 %v1312, %v1322
        %v1327 = vadd.f32 %v1325, 1e-05
        %v1328 = vrsqrt.pop %v1327
        %v1329 = vmul.f32 %v1326, %v1328
        %v1331 = vlaneseq
        %v1332 = vshrl.u32 %v1331, 7
        %v1333 = vsub.s32 0, %v1332
        %v1334 = vrot.slane %v1313, %v1333
        %v1336 = vmul.f32 %v1329, %v1334
        %v1338 = vlaneseq
        %v1339 = vshrl.u32 %v1338, 7
        %v1340 = vsub.s32 0, %v1339
        %v1341 = vrot.slane %v1314, %v1340
        %v1343 = vadd.f32 %v1336, %v1341
        %v1344 = vld [vmem:[%s16] sm:$0x1]
        %1345 = vst.msk [vmem:[#allocation2] sm:$0xff] %vm777, 0.0
        loop: start=0, step=1, limit=4
        $region120: #{tpu_custom_call.1} parent=111 // loop_pre_header
          _
        $region121: #{tpu_custom_call.1} parent=111 // loop_header
          %s1347 = sphi 0, %s1351
          %p1348 = scmp.ge.s32.totalorder %s1347, 4
        $region122: #{tpu_custom_call.1} parent=111 // loop_header_branch
          %1350 = sbr.rel (%p1348) target = $region126
        $region123: #{tpu_custom_call.1} parent=111 // loop_body
          %s1352 = smul.u32 %s1347, 32
          %s1353 = scalar_lea.vmem %s12, %s1352
          %v1354 = vld [vmem:[%s1353] sm:$0xff]
          %v1355 = vld [vmem:[%s1353 + $0x8] sm:$0xff]
          %v1356 = vld [vmem:[%s1353 + $0x10] sm:$0xff]
          %v1357 = vld [vmem:[%s1353 + $0x18] sm:$0xff]
          %v1359 = vsel %vm777, %v1343, 0
          %1361 = vmatprep.subr.mxu0 0.0
          %1362 = vmatpush1.msra.mxu0 0.0
          %1363 = vmatprep.subr.mxu0 0.0
          %1364 = vmatpush1.msra.mxu0 0.0
          %1365 = vmatprep.subr.mxu0 0.0
          %1366 = vmatpush1.msra.mxu0 0.0
          %1367 = vmatprep.subr.mxu0 0.0
          %1368 = vmatpush1.msra.mxu0 0.0
          %1369 = vmatprep.subr.mxu0 0.0
          %1370 = vmatpush1.msra.mxu0 0.0
          %1371 = vmatprep.subr.mxu0 0.0
          %1372 = vmatpush1.msra.mxu0 0.0
          %1373 = vmatprep.subr.mxu0 0.0
          %1374 = vmatpush1.msra.mxu0 0.0
          %1375 = vmatprep.subr.mxu0 0.0
          %1376 = vmatpush1.msra.mxu0 0.0
          %1377 = vmatprep.subr.mxu0 0.0
          %1378 = vmatpush1.msra.mxu0 0.0
          %1379 = vmatprep.subr.mxu0 0.0
          %1380 = vmatpush1.msra.mxu0 0.0
          %1381 = vmatprep.subr.mxu0 0.0
          %1382 = vmatpush1.msra.mxu0 0.0
          %1383 = vmatprep.subr.mxu0 0.0
          %1384 = vmatpush1.msra.mxu0 0.0
          %1385 = vmatprep.subr.mxu0 0.0
          %1386 = vmatpush1.msra.mxu0 %v1357
          %1387 = vmatprep.subr.mxu0 0.0
          %1388 = vmatpush1.msra.mxu0 %v1356
          %1389 = vmatprep.subr.mxu0 0.0
          %1390 = vmatpush1.msra.mxu0 %v1355
          %1391 = vmatprep.subr.mxu0 0.0
          %1392 = vmatpush1.msra.mxu0 %v1354
          %1393 = vmatprep.subr.mxu0 0.0
          %1394 = vmatpush2.msra.mxu0 0.0
          %1395 = vmatprep.subr.mxu0 0.0
          %1396 = vmatpush2.msra.mxu0 0.0
          %1397 = vmatprep.subr.mxu0 0.0
          %1398 = vmatpush2.msra.mxu0 0.0
          %1399 = vmatprep.subr.mxu0 0.0
          %1400 = vmatpush2.msra.mxu0 0.0
          %1401 = vmatprep.subr.mxu0 0.0
          %1402 = vmatpush2.msra.mxu0 0.0
          %1403 = vmatprep.subr.mxu0 0.0
          %1404 = vmatpush2.msra.mxu0 0.0
          %1405 = vmatprep.subr.mxu0 0.0
          %1406 = vmatpush2.msra.mxu0 0.0
          %1407 = vmatprep.subr.mxu0 0.0
          %1408 = vmatpush2.msra.mxu0 0.0
          %1409 = vmatprep.subr.mxu0 0.0
          %1410 = vmatpush2.msra.mxu0 0.0
          %1411 = vmatprep.subr.mxu0 0.0
          %1412 = vmatpush2.msra.mxu0 0.0
          %1413 = vmatprep.subr.mxu0 0.0
          %1414 = vmatpush2.msra.mxu0 0.0
          %1415 = vmatprep.subr.mxu0 0.0
          %1416 = vmatpush2.msra.mxu0 0.0
          %1417 = vmatprep.subr.mxu0 0.0
          %1418 = vmatpush2.msra.mxu0 0.0
          %1419 = vmatprep.subr.mxu0 0.0
          %1420 = vmatpush2.msra.mxu0 0.0
          %1421 = vmatprep.subr.mxu0 0.0
          %1422 = vmatpush2.msra.mxu0 0.0
          %1423 = vmatprep.subr.mxu0 0.0
          %1424 = vmatpush2.msra.mxu0 0.0
          %1425 = vmatprep.mubr.f32.mxu0 0.0
          %1426 = vmatmul.mubr.f32.gmra.mxu0 %v1359
          %v1427 = vpop.f32.mrf.mxu0
          %v1428 = vadd.f32 0.0, %v1427
          %v1429 = vpop.f32.mrf.mxu0
          %1430 = vdwg.mxu0
          %s1431 = smul.u32 %s1347, 24
          %s1432 = scalar_lea.vmem %s13, %s1431
          %v1433 = vld [vmem:[%s1432] sm:$0xff]
          %v1434 = vld [vmem:[%s1432 + $0x8] sm:$0xff]
          %v1435 = vld [vmem:[%s1432 + $0x10] sm:$0xff]
          %vm1436 = vcmask 195584
          %v1438 = vsel %vm1436, %v774, 0
          %1440 = vmatprep.subr.mxu0 0.0
          %1441 = vmatpush1.msra.mxu0 0.0
          %1442 = vmatprep.subr.mxu0 0.0
          %1443 = vmatpush1.msra.mxu0 0.0
          %1444 = vmatprep.subr.mxu0 0.0
          %1445 = vmatpush1.msra.mxu0 0.0
          %1446 = vmatprep.subr.mxu0 0.0
          %1447 = vmatpush1.msra.mxu0 0.0
          %1448 = vmatprep.subr.mxu0 0.0
          %1449 = vmatpush1.msra.mxu0 0.0
          %1450 = vmatprep.subr.mxu0 0.0
          %1451 = vmatpush1.msra.mxu0 0.0
          %1452 = vmatprep.subr.mxu0 0.0
          %1453 = vmatpush1.msra.mxu0 0.0
          %1454 = vmatprep.subr.mxu0 0.0
          %1455 = vmatpush1.msra.mxu0 0.0
          %1456 = vmatprep.subr.mxu0 0.0
          %1457 = vmatpush1.msra.mxu0 0.0
          %1458 = vmatprep.subr.mxu0 0.0
          %1459 = vmatpush1.msra.mxu0 0.0
          %1460 = vmatprep.subr.mxu0 0.0
          %1461 = vmatpush1.msra.mxu0 0.0
          %1462 = vmatprep.subr.mxu0 0.0
          %1463 = vmatpush1.msra.mxu0 0.0
          %1464 = vmatprep.subr.mxu0 0.0
          %1465 = vmatpush1.msra.mxu0 0.0
          %1466 = vmatprep.subr.mxu0 0.0
          %1467 = vmatpush1.msra.mxu0 %v1435
          %1468 = vmatprep.subr.mxu0 0.0
          %1469 = vmatpush1.msra.mxu0 %v1434
          %1470 = vmatprep.subr.mxu0 0.0
          %1471 = vmatpush1.msra.mxu0 %v1433
          %1472 = vmatprep.subr.mxu0 0.0
          %1473 = vmatpush2.msra.mxu0 0.0
          %1474 = vmatprep.subr.mxu0 0.0
          %1475 = vmatpush2.msra.mxu0 0.0
          %1476 = vmatprep.subr.mxu0 0.0
          %1477 = vmatpush2.msra.mxu0 0.0
          %1478 = vmatprep.subr.mxu0 0.0
          %1479 = vmatpush2.msra.mxu0 0.0
          %1480 = vmatprep.subr.mxu0 0.0
          %1481 = vmatpush2.msra.mxu0 0.0
          %1482 = vmatprep.subr.mxu0 0.0
          %1483 = vmatpush2.msra.mxu0 0.0
          %1484 = vmatprep.subr.mxu0 0.0
          %1485 = vmatpush2.msra.mxu0 0.0
          %1486 = vmatprep.subr.mxu0 0.0
          %1487 = vmatpush2.msra.mxu0 0.0
          %1488 = vmatprep.subr.mxu0 0.0
          %1489 = vmatpush2.msra.mxu0 0.0
          %1490 = vmatprep.subr.mxu0 0.0
          %1491 = vmatpush2.msra.mxu0 0.0
          %1492 = vmatprep.subr.mxu0 0.0
          %1493 = vmatpush2.msra.mxu0 0.0
          %1494 = vmatprep.subr.mxu0 0.0
          %1495 = vmatpush2.msra.mxu0 0.0
          %1496 = vmatprep.subr.mxu0 0.0
          %1497 = vmatpush2.msra.mxu0 0.0
          %1498 = vmatprep.subr.mxu0 0.0
          %1499 = vmatpush2.msra.mxu0 0.0
          %1500 = vmatprep.subr.mxu0 0.0
          %1501 = vmatpush2.msra.mxu0 0.0
          %1502 = vmatprep.subr.mxu0 0.0
          %1503 = vmatpush2.msra.mxu0 0.0
          %1504 = vmatprep.mubr.f32.mxu0 0.0
          %1505 = vmatmul.mubr.f32.gmra.mxu0 %v1438
          %v1506 = vpop.f32.mrf.mxu0
          %v1507 = vadd.f32 0.0, %v1506
          %v1508 = vpop.f32.mrf.mxu0
          %1509 = vdwg.mxu0
          %s1510 = scalar_lea.vmem %s14, %s1431
          %v1511 = vld [vmem:[%s1510] sm:$0xff]
          %v1512 = vld [vmem:[%s1510 + $0x8] sm:$0xff]
          %v1513 = vld [vmem:[%s1510 + $0x10] sm:$0xff]
          %1514 = vmatprep.subr.mxu0 0.0
          %1515 = vmatpush1.msra.mxu0 0.0
          %1516 = vmatprep.subr.mxu0 0.0
          %1517 = vmatpush1.msra.mxu0 0.0
          %1518 = vmatprep.subr.mxu0 0.0
          %1519 = vmatpush1.msra.mxu0 0.0
          %1520 = vmatprep.subr.mxu0 0.0
          %1521 = vmatpush1.msra.mxu0 0.0
          %1522 = vmatprep.subr.mxu0 0.0
          %1523 = vmatpush1.msra.mxu0 0.0
          %1524 = vmatprep.subr.mxu0 0.0
          %1525 = vmatpush1.msra.mxu0 0.0
          %1526 = vmatprep.subr.mxu0 0.0
          %1527 = vmatpush1.msra.mxu0 0.0
          %1528 = vmatprep.subr.mxu0 0.0
          %1529 = vmatpush1.msra.mxu0 0.0
          %1530 = vmatprep.subr.mxu0 0.0
          %1531 = vmatpush1.msra.mxu0 0.0
          %1532 = vmatprep.subr.mxu0 0.0
          %1533 = vmatpush1.msra.mxu0 0.0
          %1534 = vmatprep.subr.mxu0 0.0
          %1535 = vmatpush1.msra.mxu0 0.0
          %1536 = vmatprep.subr.mxu0 0.0
          %1537 = vmatpush1.msra.mxu0 0.0
          %1538 = vmatprep.subr.mxu0 0.0
          %1539 = vmatpush1.msra.mxu0 0.0
          %1540 = vmatprep.subr.mxu0 0.0
          %1541 = vmatpush1.msra.mxu0 %v1513
          %1542 = vmatprep.subr.mxu0 0.0
          %1543 = vmatpush1.msra.mxu0 %v1512
          %1544 = vmatprep.subr.mxu0 0.0
          %1545 = vmatpush1.msra.mxu0 %v1511
          %1546 = vmatprep.subr.mxu0 0.0
          %1547 = vmatpush2.msra.mxu0 0.0
          %1548 = vmatprep.subr.mxu0 0.0
          %1549 = vmatpush2.msra.mxu0 0.0
          %1550 = vmatprep.subr.mxu0 0.0
          %1551 = vmatpush2.msra.mxu0 0.0
          %1552 = vmatprep.subr.mxu0 0.0
          %1553 = vmatpush2.msra.mxu0 0.0
          %1554 = vmatprep.subr.mxu0 0.0
          %1555 = vmatpush2.msra.mxu0 0.0
          %1556 = vmatprep.subr.mxu0 0.0
          %1557 = vmatpush2.msra.mxu0 0.0
          %1558 = vmatprep.subr.mxu0 0.0
          %1559 = vmatpush2.msra.mxu0 0.0
          %1560 = vmatprep.subr.mxu0 0.0
          %1561 = vmatpush2.msra.mxu0 0.0
          %1562 = vmatprep.subr.mxu0 0.0
          %1563 = vmatpush2.msra.mxu0 0.0
          %1564 = vmatprep.subr.mxu0 0.0
          %1565 = vmatpush2.msra.mxu0 0.0
          %1566 = vmatprep.subr.mxu0 0.0
          %1567 = vmatpush2.msra.mxu0 0.0
          %1568 = vmatprep.subr.mxu0 0.0
          %1569 = vmatpush2.msra.mxu0 0.0
          %1570 = vmatprep.subr.mxu0 0.0
          %1571 = vmatpush2.msra.mxu0 0.0
          %1572 = vmatprep.subr.mxu0 0.0
          %1573 = vmatpush2.msra.mxu0 0.0
          %1574 = vmatprep.subr.mxu0 0.0
          %1575 = vmatpush2.msra.mxu0 0.0
          %1576 = vmatprep.subr.mxu0 0.0
          %1577 = vmatpush2.msra.mxu0 0.0
          %1578 = vmatprep.mubr.f32.mxu0 0.0
          %1579 = vmatmul.mubr.f32.gmra.mxu0 %v1438
          %v1580 = vpop.f32.mrf.mxu0
          %v1581 = vadd.f32 0.0, %v1580
          %v1582 = vpop.f32.mrf.mxu0
          %1583 = vdwg.mxu0
          %vm1584 = vcmask 64512
          %v1586 = vsel %vm1584, %v1428, 0
          %v1589 = vsel %vm1584, %v1507, 0
          %1591 = vmatprep.subr.mxu0 0.0
          %1592 = vmatpush1.xpose.msra.mxu0 0.0
          %1593 = vmatprep.subr.mxu0 0.0
          %1594 = vmatpush1.xpose.msra.mxu0 0.0
          %1595 = vmatprep.subr.mxu0 0.0
          %1596 = vmatpush1.xpose.msra.mxu0 0.0
          %1597 = vmatprep.subr.mxu0 0.0
          %1598 = vmatpush1.xpose.msra.mxu0 0.0
          %1599 = vmatprep.subr.mxu0 0.0
          %1600 = vmatpush1.xpose.msra.mxu0 0.0
          %1601 = vmatprep.subr.mxu0 0.0
          %1602 = vmatpush1.xpose.msra.mxu0 0.0
          %1603 = vmatprep.subr.mxu0 0.0
          %1604 = vmatpush1.xpose.msra.mxu0 0.0
          %1605 = vmatprep.subr.mxu0 0.0
          %1606 = vmatpush1.xpose.msra.mxu0 0.0
          %1607 = vmatprep.subr.mxu0 0.0
          %1608 = vmatpush1.xpose.msra.mxu0 0.0
          %1609 = vmatprep.subr.mxu0 0.0
          %1610 = vmatpush1.xpose.msra.mxu0 0.0
          %1611 = vmatprep.subr.mxu0 0.0
          %1612 = vmatpush1.xpose.msra.mxu0 0.0
          %1613 = vmatprep.subr.mxu0 0.0
          %1614 = vmatpush1.xpose.msra.mxu0 0.0
          %1615 = vmatprep.subr.mxu0 0.0
          %1616 = vmatpush1.xpose.msra.mxu0 0.0
          %1617 = vmatprep.subr.mxu0 0.0
          %1618 = vmatpush1.xpose.msra.mxu0 0.0
          %1619 = vmatprep.subr.mxu0 0.0
          %1620 = vmatpush1.xpose.msra.mxu0 0.0
          %1621 = vmatprep.subr.mxu0 0.0
          %1622 = vmatpush1.xpose.msra.mxu0 %v1589
          %1623 = vmatprep.subr.mxu0 0.0
          %1624 = vmatpush2.xpose.msra.mxu0 0.0
          %1625 = vmatprep.subr.mxu0 0.0
          %1626 = vmatpush2.xpose.msra.mxu0 0.0
          %1627 = vmatprep.subr.mxu0 0.0
          %1628 = vmatpush2.xpose.msra.mxu0 0.0
          %1629 = vmatprep.subr.mxu0 0.0
          %1630 = vmatpush2.xpose.msra.mxu0 0.0
          %1631 = vmatprep.subr.mxu0 0.0
          %1632 = vmatpush2.xpose.msra.mxu0 0.0
          %1633 = vmatprep.subr.mxu0 0.0
          %1634 = vmatpush2.xpose.msra.mxu0 0.0
          %1635 = vmatprep.subr.mxu0 0.0
          %1636 = vmatpush2.xpose.msra.mxu0 0.0
          %1637 = vmatprep.subr.mxu0 0.0
          %1638 = vmatpush2.xpose.msra.mxu0 0.0
          %1639 = vmatprep.subr.mxu0 0.0
          %1640 = vmatpush2.xpose.msra.mxu0 0.0
          %1641 = vmatprep.subr.mxu0 0.0
          %1642 = vmatpush2.xpose.msra.mxu0 0.0
          %1643 = vmatprep.subr.mxu0 0.0
          %1644 = vmatpush2.xpose.msra.mxu0 0.0
          %1645 = vmatprep.subr.mxu0 0.0
          %1646 = vmatpush2.xpose.msra.mxu0 0.0
          %1647 = vmatprep.subr.mxu0 0.0
          %1648 = vmatpush2.xpose.msra.mxu0 0.0
          %1649 = vmatprep.subr.mxu0 0.0
          %1650 = vmatpush2.xpose.msra.mxu0 0.0
          %1651 = vmatprep.subr.mxu0 0.0
          %1652 = vmatpush2.xpose.msra.mxu0 0.0
          %1653 = vmatprep.subr.mxu0 0.0
          %1654 = vmatpush2.xpose.msra.mxu0 0.0
          %1655 = vmatprep.mubr.f32.mxu0 0.0
          %1656 = vmatmul.mubr.f32.gmra.mxu0 %v1586
          %v1657 = vpop.f32.mrf.mxu0
          %v1658 = vadd.f32 0.0, %v1657
          %v1659 = vpop.f32.mrf.mxu0
          %1660 = vdwg.mxu0
          %v1661 = vsel %vm1584, %v1658, -inf
          %1662 = vmax.xlane.f32.xlu0 %v1661
          %v1663 = vpop.xlane.xlu0 %1662
          %v1664 = vsub.f32 %v1658, %v1663
          %v1665 = vmul.f32 %v1664, 1.442695
          %v1666 = vpow.pop %v1665
          %v1667 = vsel %vm1584, %v1666, 0.0
          %1668 = vadd.xlane.f32.xlu0 %v1667
          %v1669 = vpop.xlane.xlu0 %1668
          %v1670 = vrcp.pop %v1669
          %v1671 = vmul.f32 %v1666, %v1670
          %v1673 = vsel %vm1584, %v1671, 0
          %1675 = vmatprep.subr.mxu0 0.0
          %1676 = vmatpush1.msra.mxu0 0.0
          %1677 = vmatprep.subr.mxu0 0.0
          %1678 = vmatpush1.msra.mxu0 0.0
          %1679 = vmatprep.subr.mxu0 0.0
          %1680 = vmatpush1.msra.mxu0 0.0
          %1681 = vmatprep.subr.mxu0 0.0
          %1682 = vmatpush1.msra.mxu0 0.0
          %1683 = vmatprep.subr.mxu0 0.0
          %1684 = vmatpush1.msra.mxu0 0.0
          %1685 = vmatprep.subr.mxu0 0.0
          %1686 = vmatpush1.msra.mxu0 0.0
          %1687 = vmatprep.subr.mxu0 0.0
          %1688 = vmatpush1.msra.mxu0 0.0
          %1689 = vmatprep.subr.mxu0 0.0
          %1690 = vmatpush1.msra.mxu0 0.0
          %1691 = vmatprep.subr.mxu0 0.0
          %1692 = vmatpush1.msra.mxu0 0.0
          %1693 = vmatprep.subr.mxu0 0.0
          %1694 = vmatpush1.msra.mxu0 0.0
          %1695 = vmatprep.subr.mxu0 0.0
          %1696 = vmatpush1.msra.mxu0 0.0
          %1697 = vmatprep.subr.mxu0 0.0
          %1698 = vmatpush1.msra.mxu0 0.0
          %1699 = vmatprep.subr.mxu0 0.0
          %1700 = vmatpush1.msra.mxu0 0.0
          %1701 = vmatprep.subr.mxu0 0.0
          %1702 = vmatpush1.msra.mxu0 0.0
          %1703 = vmatprep.subr.mxu0 0.0
          %1704 = vmatpush1.msra.mxu0 0.0
          %1705 = vmatprep.subr.mxu0 0.0
          %1706 = vmatpush1.msra.mxu0 %v1581
          %1707 = vmatprep.subr.mxu0 0.0
          %1708 = vmatpush2.msra.mxu0 0.0
          %1709 = vmatprep.subr.mxu0 0.0
          %1710 = vmatpush2.msra.mxu0 0.0
          %1711 = vmatprep.subr.mxu0 0.0
          %1712 = vmatpush2.msra.mxu0 0.0
          %1713 = vmatprep.subr.mxu0 0.0
          %1714 = vmatpush2.msra.mxu0 0.0
          %1715 = vmatprep.subr.mxu0 0.0
          %1716 = vmatpush2.msra.mxu0 0.0
          %1717 = vmatprep.subr.mxu0 0.0
          %1718 = vmatpush2.msra.mxu0 0.0
          %1719 = vmatprep.subr.mxu0 0.0
          %1720 = vmatpush2.msra.mxu0 0.0
          %1721 = vmatprep.subr.mxu0 0.0
          %1722 = vmatpush2.msra.mxu0 0.0
          %1723 = vmatprep.subr.mxu0 0.0
          %1724 = vmatpush2.msra.mxu0 0.0
          %1725 = vmatprep.subr.mxu0 0.0
          %1726 = vmatpush2.msra.mxu0 0.0
          %1727 = vmatprep.subr.mxu0 0.0
          %1728 = vmatpush2.msra.mxu0 0.0
          %1729 = vmatprep.subr.mxu0 0.0
          %1730 = vmatpush2.msra.mxu0 0.0
          %1731 = vmatprep.subr.mxu0 0.0
          %1732 = vmatpush2.msra.mxu0 0.0
          %1733 = vmatprep.subr.mxu0 0.0
          %1734 = vmatpush2.msra.mxu0 0.0
          %1735 = vmatprep.subr.mxu0 0.0
          %1736 = vmatpush2.msra.mxu0 0.0
          %1737 = vmatprep.subr.mxu0 0.0
          %1738 = vmatpush2.msra.mxu0 0.0
          %1739 = vmatprep.mubr.f32.mxu0 0.0
          %1740 = vmatmul.mubr.f32.gmra.mxu0 %v1673
          %v1741 = vpop.f32.mrf.mxu0
          %v1742 = vadd.f32 0.0, %v1741
          %v1743 = vpop.f32.mrf.mxu0
          %1744 = vdwg.mxu0
          %v1745 = vld [vmem:[#allocation2] sm:$0xff]
          %s1746 = smul.u32 %s1347, 8
          %s1747 = scalar_lea.vmem %s15, %s1746
          %v1748 = vld [vmem:[%s1747] sm:$0xff]
          %v1750 = vsel %vm1584, %v1742, 0
          %1752 = vmatprep.subr.mxu0 0.0
          %1753 = vmatpush1.msra.mxu0 0.0
          %1754 = vmatprep.subr.mxu0 0.0
          %1755 = vmatpush1.msra.mxu0 0.0
          %1756 = vmatprep.subr.mxu0 0.0
          %1757 = vmatpush1.msra.mxu0 0.0
          %1758 = vmatprep.subr.mxu0 0.0
          %1759 = vmatpush1.msra.mxu0 0.0
          %1760 = vmatprep.subr.mxu0 0.0
          %1761 = vmatpush1.msra.mxu0 0.0
          %1762 = vmatprep.subr.mxu0 0.0
          %1763 = vmatpush1.msra.mxu0 0.0
          %1764 = vmatprep.subr.mxu0 0.0
          %1765 = vmatpush1.msra.mxu0 0.0
          %1766 = vmatprep.subr.mxu0 0.0
          %1767 = vmatpush1.msra.mxu0 0.0
          %1768 = vmatprep.subr.mxu0 0.0
          %1769 = vmatpush1.msra.mxu0 0.0
          %1770 = vmatprep.subr.mxu0 0.0
          %1771 = vmatpush1.msra.mxu0 0.0
          %1772 = vmatprep.subr.mxu0 0.0
          %1773 = vmatpush1.msra.mxu0 0.0
          %1774 = vmatprep.subr.mxu0 0.0
          %1775 = vmatpush1.msra.mxu0 0.0
          %1776 = vmatprep.subr.mxu0 0.0
          %1777 = vmatpush1.msra.mxu0 0.0
          %1778 = vmatprep.subr.mxu0 0.0
          %1779 = vmatpush1.msra.mxu0 0.0
          %1780 = vmatprep.subr.mxu0 0.0
          %1781 = vmatpush1.msra.mxu0 0.0
          %1782 = vmatprep.subr.mxu0 0.0
          %1783 = vmatpush1.msra.mxu0 %v1748
          %1784 = vmatprep.subr.mxu0 0.0
          %1785 = vmatpush2.msra.mxu0 0.0
          %1786 = vmatprep.subr.mxu0 0.0
          %1787 = vmatpush2.msra.mxu0 0.0
          %1788 = vmatprep.subr.mxu0 0.0
          %1789 = vmatpush2.msra.mxu0 0.0
          %1790 = vmatprep.subr.mxu0 0.0
          %1791 = vmatpush2.msra.mxu0 0.0
          %1792 = vmatprep.subr.mxu0 0.0
          %1793 = vmatpush2.msra.mxu0 0.0
          %1794 = vmatprep.subr.mxu0 0.0
          %1795 = vmatpush2.msra.mxu0 0.0
          %1796 = vmatprep.subr.mxu0 0.0
          %1797 = vmatpush2.msra.mxu0 0.0
          %1798 = vmatprep.subr.mxu0 0.0
          %1799 = vmatpush2.msra.mxu0 0.0
          %1800 = vmatprep.subr.mxu0 0.0
          %1801 = vmatpush2.msra.mxu0 0.0
          %1802 = vmatprep.subr.mxu0 0.0
          %1803 = vmatpush2.msra.mxu0 0.0
          %1804 = vmatprep.subr.mxu0 0.0
          %1805 = vmatpush2.msra.mxu0 0.0
          %1806 = vmatprep.subr.mxu0 0.0
          %1807 = vmatpush2.msra.mxu0 0.0
          %1808 = vmatprep.subr.mxu0 0.0
          %1809 = vmatpush2.msra.mxu0 0.0
          %1810 = vmatprep.subr.mxu0 0.0
          %1811 = vmatpush2.msra.mxu0 0.0
          %1812 = vmatprep.subr.mxu0 0.0
          %1813 = vmatpush2.msra.mxu0 0.0
          %1814 = vmatprep.subr.mxu0 0.0
          %1815 = vmatpush2.msra.mxu0 0.0
          %1816 = vmatprep.mubr.f32.mxu0 0.0
          %1817 = vmatmul.mubr.f32.gmra.mxu0 %v1750
          %v1818 = vpop.f32.mrf.mxu0
          %v1819 = vadd.f32 0.0, %v1818
          %v1820 = vpop.f32.mrf.mxu0
          %1821 = vdwg.mxu0
          %v1822 = vadd.f32 %v1745, %v1819
          %1823 = vst.msk [vmem:[#allocation2] sm:$0xff] %vm777, %v1822
        $region124: #{tpu_custom_call.1} parent=111 // loop_footer
          %s1351 = sadd.s32 1, %s1347
        $region125: #{tpu_custom_call.1} parent=111 // loop_footer_branch
          %1346 = sbr.rel target = $region121
        $region126: #{tpu_custom_call.1} parent=111 // loop_exit
          _
        %v1824 = vld [vmem:[#allocation2] sm:$0xff]
        %v1826 = vlaneseq
        %v1827 = vshrl.u32 %v1826, 7
        %v1828 = vsub.s32 0, %v1827
        %v1829 = vrot.slane %v1344, %v1828
        %v1831 = vadd.f32 %v1824, %v1829
        %v1832 = vadd.f32 %v1312, %v1831
        %v1833 = vld [vmem:[%s17] sm:$0x1]
        %v1834 = vld [vmem:[%s18] sm:$0x1]
        %v1835 = vsel %vm777, %v1832, 0.0
        %1836 = vadd.xlane.f32.xlu0 %v1835
        %v1837 = vpop.xlane.xlu0 %1836
        %v1838 = vmul.f32 %v1832, %v1832
        %v1839 = vsel %vm777, %v1838, 0.0
        %1840 = vadd.xlane.f32.xlu0 %v1839
        %v1841 = vpop.xlane.xlu0 %1840
        %v1842 = vmul.f32 %v1837, 0.03125
        %v1843 = vmul.f32 %v1841, 0.03125
        %v1844 = vmul.f32 %v1842, %v1842
        %v1845 = vsub.f32 %v1843, %v1844
        %v1846 = vsub.f32 %v1832, %v1842
        %v1847 = vadd.f32 %v1845, 1e-05
        %v1848 = vrsqrt.pop %v1847
        %v1849 = vmul.f32 %v1846, %v1848
        %v1851 = vlaneseq
        %v1852 = vshrl.u32 %v1851, 7
        %v1853 = vsub.s32 0, %v1852
        %v1854 = vrot.slane %v1833, %v1853
        %v1856 = vmul.f32 %v1849, %v1854
        %v1858 = vlaneseq
        %v1859 = vshrl.u32 %v1858, 7
        %v1860 = vsub.s32 0, %v1859
        %v1861 = vrot.slane %v1834, %v1860
        %v1863 = vadd.f32 %v1856, %v1861
        %v1864 = vld [vmem:[%s19] sm:$0xff]
        %v1865 = vld [vmem:[%s19 + $0x8] sm:$0xff]
        %v1866 = vld [vmem:[%s19 + $0x10] sm:$0xff]
        %v1867 = vld [vmem:[%s19 + $0x18] sm:$0xff]
        %v1868 = vld [vmem:[%s20] sm:$0x1]
        %v1870 = vlaneseq
        %v1871 = vshrl.u32 %v1870, 7
        %v1872 = vsub.s32 0, %v1871
        %v1873 = vrot.slane %v1868, %v1872
        %v1876 = vsel %vm777, %v1863, 0
        %1878 = vmatprep.subr.mxu0 0.0
        %1879 = vmatpush1.msra.mxu0 0.0
        %1880 = vmatprep.subr.mxu0 0.0
        %1881 = vmatpush1.msra.mxu0 0.0
        %1882 = vmatprep.subr.mxu0 0.0
        %1883 = vmatpush1.msra.mxu0 0.0
        %1884 = vmatprep.subr.mxu0 0.0
        %1885 = vmatpush1.msra.mxu0 0.0
        %1886 = vmatprep.subr.mxu0 0.0
        %1887 = vmatpush1.msra.mxu0 0.0
        %1888 = vmatprep.subr.mxu0 0.0
        %1889 = vmatpush1.msra.mxu0 0.0
        %1890 = vmatprep.subr.mxu0 0.0
        %1891 = vmatpush1.msra.mxu0 0.0
        %1892 = vmatprep.subr.mxu0 0.0
        %1893 = vmatpush1.msra.mxu0 0.0
        %1894 = vmatprep.subr.mxu0 0.0
        %1895 = vmatpush1.msra.mxu0 0.0
        %1896 = vmatprep.subr.mxu0 0.0
        %1897 = vmatpush1.msra.mxu0 0.0
        %1898 = vmatprep.subr.mxu0 0.0
        %1899 = vmatpush1.msra.mxu0 0.0
        %1900 = vmatprep.subr.mxu0 0.0
        %1901 = vmatpush1.msra.mxu0 0.0
        %1902 = vmatprep.subr.mxu0 0.0
        %1903 = vmatpush1.msra.mxu0 %v1867
        %1904 = vmatprep.subr.mxu0 0.0
        %1905 = vmatpush1.msra.mxu0 %v1866
        %1906 = vmatprep.subr.mxu0 0.0
        %1907 = vmatpush1.msra.mxu0 %v1865
        %1908 = vmatprep.subr.mxu0 0.0
        %1909 = vmatpush1.msra.mxu0 %v1864
        %1910 = vmatprep.subr.mxu0 0.0
        %1911 = vmatpush2.msra.mxu0 0.0
        %1912 = vmatprep.subr.mxu0 0.0
        %1913 = vmatpush2.msra.mxu0 0.0
        %1914 = vmatprep.subr.mxu0 0.0
        %1915 = vmatpush2.msra.mxu0 0.0
        %1916 = vmatprep.subr.mxu0 0.0
        %1917 = vmatpush2.msra.mxu0 0.0
        %1918 = vmatprep.subr.mxu0 0.0
        %1919 = vmatpush2.msra.mxu0 0.0
        %1920 = vmatprep.subr.mxu0 0.0
        %1921 = vmatpush2.msra.mxu0 0.0
        %1922 = vmatprep.subr.mxu0 0.0
        %1923 = vmatpush2.msra.mxu0 0.0
        %1924 = vmatprep.subr.mxu0 0.0
        %1925 = vmatpush2.msra.mxu0 0.0
        %1926 = vmatprep.subr.mxu0 0.0
        %1927 = vmatpush2.msra.mxu0 0.0
        %1928 = vmatprep.subr.mxu0 0.0
        %1929 = vmatpush2.msra.mxu0 0.0
        %1930 = vmatprep.subr.mxu0 0.0
        %1931 = vmatpush2.msra.mxu0 0.0
        %1932 = vmatprep.subr.mxu0 0.0
        %1933 = vmatpush2.msra.mxu0 0.0
        %1934 = vmatprep.subr.mxu0 0.0
        %1935 = vmatpush2.msra.mxu0 0.0
        %1936 = vmatprep.subr.mxu0 0.0
        %1937 = vmatpush2.msra.mxu0 0.0
        %1938 = vmatprep.subr.mxu0 0.0
        %1939 = vmatpush2.msra.mxu0 0.0
        %1940 = vmatprep.subr.mxu0 0.0
        %1941 = vmatpush2.msra.mxu0 0.0
        %1942 = vmatprep.mubr.f32.mxu0 0.0
        %1943 = vmatmul.mubr.f32.gmra.mxu0 %v1876
        %v1944 = vpop.f32.mrf.mxu0
        %v1945 = vadd.f32 %v1873, %v1944
        %v1946 = vpop.f32.mrf.mxu0
        %1947 = vdwg.mxu0
        %v1948 = vmul.f32 %v1945, 0.5
        %v1949 = vmul.f32 %v1945, 0.70710677
        %v1950 = verf.f32.pop %v1949
        %v1951 = vadd.f32 %v1950, 1.0
        %v1952 = vmul.f32 %v1948, %v1951
        %v1953 = vld [vmem:[%s21] sm:$0xff]
        %v1954 = vld [vmem:[%s21 + $0x8] sm:$0xff]
        %v1955 = vld [vmem:[%s21 + $0x10] sm:$0xff]
        %v1956 = vld [vmem:[%s21 + $0x18] sm:$0xff]
        %v1957 = vld [vmem:[%s21 + $0x20] sm:$0xff]
        %v1958 = vld [vmem:[%s21 + $0x28] sm:$0xff]
        %v1959 = vld [vmem:[%s21 + $0x30] sm:$0xff]
        %v1960 = vld [vmem:[%s21 + $0x38] sm:$0xff]
        %v1961 = vld [vmem:[%s21 + $0x40] sm:$0xff]
        %v1962 = vld [vmem:[%s21 + $0x48] sm:$0xff]
        %v1963 = vld [vmem:[%s21 + $0x50] sm:$0xff]
        %v1964 = vld [vmem:[%s21 + $0x58] sm:$0xff]
        %v1965 = vld [vmem:[%s21 + $0x60] sm:$0xff]
        %v1966 = vld [vmem:[%s21 + $0x68] sm:$0xff]
        %v1967 = vld [vmem:[%s21 + $0x70] sm:$0xff]
        %v1968 = vld [vmem:[%s21 + $0x78] sm:$0xff]
        %1969 = vmatprep.subr.mxu0 0.0
        %1970 = vmatpush1.msra.mxu0 %v1968
        %1971 = vmatprep.subr.mxu0 0.0
        %1972 = vmatpush1.msra.mxu0 %v1967
        %1973 = vmatprep.subr.mxu0 0.0
        %1974 = vmatpush1.msra.mxu0 %v1966
        %1975 = vmatprep.subr.mxu0 0.0
        %1976 = vmatpush1.msra.mxu0 %v1965
        %1977 = vmatprep.subr.mxu0 0.0
        %1978 = vmatpush1.msra.mxu0 %v1964
        %1979 = vmatprep.subr.mxu0 0.0
        %1980 = vmatpush1.msra.mxu0 %v1963
        %1981 = vmatprep.subr.mxu0 0.0
        %1982 = vmatpush1.msra.mxu0 %v1962
        %1983 = vmatprep.subr.mxu0 0.0
        %1984 = vmatpush1.msra.mxu0 %v1961
        %1985 = vmatprep.subr.mxu0 0.0
        %1986 = vmatpush1.msra.mxu0 %v1960
        %1987 = vmatprep.subr.mxu0 0.0
        %1988 = vmatpush1.msra.mxu0 %v1959
        %1989 = vmatprep.subr.mxu0 0.0
        %1990 = vmatpush1.msra.mxu0 %v1958
        %1991 = vmatprep.subr.mxu0 0.0
        %1992 = vmatpush1.msra.mxu0 %v1957
        %1993 = vmatprep.subr.mxu0 0.0
        %1994 = vmatpush1.msra.mxu0 %v1956
        %1995 = vmatprep.subr.mxu0 0.0
        %1996 = vmatpush1.msra.mxu0 %v1955
        %1997 = vmatprep.subr.mxu0 0.0
        %1998 = vmatpush1.msra.mxu0 %v1954
        %1999 = vmatprep.subr.mxu0 0.0
        %2000 = vmatpush1.msra.mxu0 %v1953
        %2001 = vmatprep.subr.mxu0 0.0
        %2002 = vmatpush2.msra.mxu0 0.0
        %2003 = vmatprep.subr.mxu0 0.0
        %2004 = vmatpush2.msra.mxu0 0.0
        %2005 = vmatprep.subr.mxu0 0.0
        %2006 = vmatpush2.msra.mxu0 0.0
        %2007 = vmatprep.subr.mxu0 0.0
        %2008 = vmatpush2.msra.mxu0 0.0
        %2009 = vmatprep.subr.mxu0 0.0
        %2010 = vmatpush2.msra.mxu0 0.0
        %2011 = vmatprep.subr.mxu0 0.0
        %2012 = vmatpush2.msra.mxu0 0.0
        %2013 = vmatprep.subr.mxu0 0.0
        %2014 = vmatpush2.msra.mxu0 0.0
        %2015 = vmatprep.subr.mxu0 0.0
        %2016 = vmatpush2.msra.mxu0 0.0
        %2017 = vmatprep.subr.mxu0 0.0
        %2018 = vmatpush2.msra.mxu0 0.0
        %2019 = vmatprep.subr.mxu0 0.0
        %2020 = vmatpush2.msra.mxu0 0.0
        %2021 = vmatprep.subr.mxu0 0.0
        %2022 = vmatpush2.msra.mxu0 0.0
        %2023 = vmatprep.subr.mxu0 0.0
        %2024 = vmatpush2.msra.mxu0 0.0
        %2025 = vmatprep.subr.mxu0 0.0
        %2026 = vmatpush2.msra.mxu0 0.0
        %2027 = vmatprep.subr.mxu0 0.0
        %2028 = vmatpush2.msra.mxu0 0.0
        %2029 = vmatprep.subr.mxu0 0.0
        %2030 = vmatpush2.msra.mxu0 0.0
        %2031 = vmatprep.subr.mxu0 0.0
        %2032 = vmatpush2.msra.mxu0 0.0
        %2033 = vmatprep.mubr.f32.mxu0 0.0
        %2034 = vmatmul.mubr.f32.gmra.mxu0 %v1952
        %v2035 = vpop.f32.mrf.mxu0
        %v2036 = vadd.f32 0.0, %v2035
        %v2037 = vpop.f32.mrf.mxu0
        %2038 = vdwg.mxu0
        %v2039 = vadd.f32 %v1832, %v2036
        %v2040 = vld [vmem:[%s22] sm:$0x1]
        %v2042 = vlaneseq
        %v2043 = vshrl.u32 %v2042, 7
        %v2044 = vsub.s32 0, %v2043
        %v2045 = vrot.slane %v2040, %v2044
        %v2047 = vadd.f32 %v2039, %v2045
        %2048 = vst.msk [vmem:[%s753] sm:$0xff] %vm777, %v2047
        %s2049 = sand.u32 %s559, 1
        %s2050 = scalar_lea.sflag [#allocation4], %s2049
        %s2051 = sand.u32 %s559, 1
        %s2052 = smul.addr %s2051, 8
        %s2053 = scalar_lea.vmem [#allocation3], %s2052
        // Predicated region
        $region127: #{tpu_custom_call.1} parent=111 // pred_check
          %p2054 = pneg %p569
        $region128: #{tpu_custom_call.1} parent=111 // pred_check_branch
          %2056 = sbr.rel (%p2054) target = $region130
        $region129: #{tpu_custom_call.1} parent=111 // pred_region
          %s2058 = ssub.s32 128, 128
          %2059 = vsyncadd %s2050, %s2058
          %s2060 = smul.addr %s41, 2
          %s2061 = sadd.s32 %s42, %s2060
          %s2062 = smul.addr %s2061, 128
          %s2063 = scalar_lea.hbm %s23, %s2062
          %s2065 = sshll.u32 %s2053, 4
          %s2066 = int_to_ptr.vmem [resolvable:$true] %s2065
          %2068 = dma.vmem_to_hbm [thread:$0]  %s2066, 128, %s2063, %s2050
        $region130: #{tpu_custom_call.1} parent=111 // pred_fallthru
          _
      $region112: #{tpu_custom_call.1} parent=5 // pred_fallthru
        _
      %p2069 = scmp.le.s32.totalorder 2, %s32
      // Predicated region
      $region131: #{tpu_custom_call.1} parent=5 // pred_check
        %p2070 = pneg %p2069
      $region132: #{tpu_custom_call.1} parent=5 // pred_check_branch
        %2072 = sbr.rel (%p2070) target = $region134
      $region133: #{tpu_custom_call.1} parent=5 // pred_region
        %s2073 = ssub.s32 %s32, 2
        // Predicated region
        $region135: #{tpu_custom_call.1} parent=133 // pred_check
          %p2074 = pneg %p575
        $region136: #{tpu_custom_call.1} parent=133 // pred_check_branch
          %2076 = sbr.rel (%p2074) target = $region138
        $region137: #{tpu_custom_call.1} parent=133 // pred_region
          %s2077 = sand.u32 %s560, 1
          %s2078 = scalar_lea.sflag [#allocation4], %s2077
          %s2079 = sand.u32 %s560, 1
          %s2080 = smul.addr %s2079, 8
          %s2081 = scalar_lea.vmem [#allocation3], %s2080
          %2082 = dma.done %s2078, 128
        $region138: #{tpu_custom_call.1} parent=133 // pred_fallthru
          _
      $region134: #{tpu_custom_call.1} parent=5 // pred_fallthru
        _
    $region6: #{tpu_custom_call.1} parent=1 // loop_footer
      %s36 = sadd.s32 1, %s32
    $region7: #{tpu_custom_call.1} parent=1 // loop_footer_branch
      %31 = sbr.rel target = $region3
    $region8: #{tpu_custom_call.1} parent=1 // loop_exit
      _
    %2083 = vsyncpa [#allocation4], 1
    %s2084 = scalar_lea.sflag [#allocation4], 1
    %2085 = vsyncpa %s2084, 1

</llo_original>
